<compile_context>
chip_gen: v7x
topology: tpu7x:2x2x1
jax: 0.10.0
libtpu: 0.0.40
codegen_flags: <defaults>
</compile_context>

<pallas_src>
import functools

import jax
import jax.numpy as jnp
from jax import lax
from jax.experimental import pallas as pl
from jax.experimental.pallas import tpu as pltpu


def _round_up(x, m):
    return (x + m - 1) // m * m


def _recurrent_kernel(xs_ref, h0_ref, wih3_ref, whh3_ref, bih3_ref, bhh3_ref,
                      wl_ref, bl_ref, out_ref, hN_ref, hs_scr, *, T, B):
    """Single-invocation GRU forward + fused Linear head.

    Phase 1 (time-parallel): input projection for all timesteps at once.
    Phase 2 (serial):        the hidden-state recurrence, fully unrolled.
    Phase 3 (time-parallel): Linear head over all hidden states at once.
    """
    F = xs_ref.shape[-1]
    O = wl_ref.shape[-1]

    # ---- Phase 1: hoisted input projection (does not depend on h) ----------
    # Three gate-aligned (T*B, F) x (F, H) MXU matmuls, bf16 in / f32 acc,
    # with b_ih folded in here (not re-added every serial step).
    x_flat = xs_ref[...].reshape(T * B, F).astype(jnp.bfloat16)
    gi_r = jnp.dot(x_flat, wih3_ref[0], preferred_element_type=jnp.float32) + bih3_ref[0]
    gi_z = jnp.dot(x_flat, wih3_ref[1], preferred_element_type=jnp.float32) + bih3_ref[1]
    gi_n = jnp.dot(x_flat, wih3_ref[2], preferred_element_type=jnp.float32) + bih3_ref[2]

    whr = whh3_ref[0]          # (H, H) bf16, per-gate (lane-aligned outputs)
    whz = whh3_ref[1]
    whn = whh3_ref[2]
    bhr = bhh3_ref[0]          # (1, H) f32
    bhz = bhh3_ref[1]
    bhn = bhh3_ref[2]

    # ---- Phase 2: serial recurrence (static T -> fully unrolled) -----------
    # Per-step critical path: three small (B,H)x(H,H) MXU matmuls + f32
    # VPU/EUP gate math. No fused-gate lane slicing, no per-step bias reload.
    h = h0_ref[...]            # (B, H) float32 carried hidden state
    for t in range(T):
        h_bf = h.astype(jnp.bfloat16)
        gh_r = jnp.dot(h_bf, whr, preferred_element_type=jnp.float32) + bhr
        gh_z = jnp.dot(h_bf, whz, preferred_element_type=jnp.float32) + bhz
        gh_n = jnp.dot(h_bf, whn, preferred_element_type=jnp.float32) + bhn
        lo, hi = t * B, (t + 1) * B            # static slices (free)
        r = jax.nn.sigmoid(gi_r[lo:hi] + gh_r)
        z = jax.nn.sigmoid(gi_z[lo:hi] + gh_z)
        n = jnp.tanh(gi_n[lo:hi] + r * gh_n)
        h = (1.0 - z) * n + z * h
        hs_scr[lo:hi, :] = h                   # stash h_t for the hoisted head

    hN_ref[...] = h.astype(hN_ref.dtype)

    # ---- Phase 3: hoisted Linear head, one lane-dense output store ---------
    hs = hs_scr[...].astype(jnp.bfloat16)      # (T*B, H)
    y = jnp.dot(hs, wl_ref[...], preferred_element_type=jnp.float32) + bl_ref[...]
    out_ref[...] = y.reshape(T, B, O).astype(out_ref.dtype)


def _pad_rows(a, axis, target):
    pad = target - a.shape[axis]
    if pad == 0:
        return a
    widths = [(0, 0)] * a.ndim
    widths[axis] = (0, pad)
    return jnp.pad(a, widths)


@functools.partial(jax.jit, static_argnames=("include_h",))
def recurrent_forward(xs, h_0, params, include_h=False):
    """Forward pass of `Recurrent` (eval mode, num_layers=1 GRU)."""
    T, B, F = xs.shape
    H = params["w_hh"].shape[1]
    O = params["w_lin"].shape[0]

    if h_0 is None:
        h_0 = jnp.zeros((1, B, H), jnp.float32)

    # Pad batch to a sublane multiple so every per-step tile is dense.
    # (For production shapes, also pad F/H/O toward multiples of 128 lanes.)
    Bp = max(8, _round_up(B, 8))
    xs_p = _pad_rows(xs.astype(jnp.float32), 1, Bp)
    h0_p = _pad_rows(h_0[0].astype(jnp.float32), 0, Bp)

    # Gate-split, pre-transposed weights (PyTorch gate order [r, z, n]) so each
    # gate's matmul output starts at lane 0. bf16 = native MXU input dtype.
    w_ih3 = params["w_ih"].reshape(3, H, F)
    w_hh3 = params["w_hh"].reshape(3, H, H)
    wih3_t = jnp.transpose(w_ih3, (0, 2, 1)).astype(jnp.bfloat16)   # (3, F, H)
    whh3_t = jnp.transpose(w_hh3, (0, 2, 1)).astype(jnp.bfloat16)   # (3, H, H)
    bih3 = params["b_ih"].reshape(3, 1, H).astype(jnp.float32)
    bhh3 = params["b_hh"].reshape(3, 1, H).astype(jnp.float32)
    wl_t = params["w_lin"].T.astype(jnp.bfloat16)                   # (H, O)
    bl = params["b_lin"].reshape(1, O).astype(jnp.float32)

    kernel = functools.partial(_recurrent_kernel, T=T, B=Bp)
    vmem = lambda: pl.BlockSpec(memory_space=pltpu.MemorySpace.VMEM)

    out, h_n = pl.pallas_call(
        kernel,
        out_shape=(
            jax.ShapeDtypeStruct((T, Bp, O), jnp.float32),
            jax.ShapeDtypeStruct((Bp, H), jnp.float32),
        ),
        # Single invocation (no grid): whole operands resident in VMEM, no
        # per-timestep pipeline/DMA overhead, weights loaded exactly once.
        in_specs=[vmem() for _ in range(8)],
        out_specs=(vmem(), vmem()),
        scratch_shapes=[pltpu.VMEM((T * Bp, H), jnp.float32)],   # h_t history
    )(xs_p, h0_p, wih3_t, whh3_t, bih3, bhh3, wl_t, bl)

    out = out[:, :B, :].astype(xs.dtype)
    h_n = h_n[None, :B, :].astype(xs.dtype)
    if include_h:
        return out, h_n
    return out


def _reference_forward(xs, h_0, params):
    """Pure-JAX float32 reference (lax.scan GRU) for correctness checking."""
    H = params["w_hh"].shape[1]
    wih_t, whh_t = params["w_ih"].T, params["w_hh"].T
    bih, bhh = params["b_ih"], params["b_hh"]

    def step(h, x_t):
        gi = x_t @ wih_t + bih
        gh = h @ whh_t + bhh
        r = jax.nn.sigmoid(gi[:, :H] + gh[:, :H])
        z = jax.nn.sigmoid(gi[:, H:2 * H] + gh[:, H:2 * H])
        n = jnp.tanh(gi[:, 2 * H:] + r * gh[:, 2 * H:])
        h_new = (1.0 - z) * n + z * h
        return h_new, h_new

    h_last, hs = lax.scan(step, h_0[0], xs)
    out = hs @ params["w_lin"].T + params["b_lin"]
    return out, h_last[None]


def init_params(key, feat_dim, hidden_dim, out_dim):
    """Deterministic init matching PyTorch shapes (uniform, a la nn.GRU)."""
    ks = jax.random.split(key, 6)
    s = 1.0 / jnp.sqrt(hidden_dim)
    u = lambda k, shape: jax.random.uniform(k, shape, jnp.float32, -s, s)
    return {
        "w_ih": u(ks[0], (3 * hidden_dim, feat_dim)),
        "w_hh": u(ks[1], (3 * hidden_dim, hidden_dim)),
        "b_ih": u(ks[2], (3 * hidden_dim,)),
        "b_hh": u(ks[3], (3 * hidden_dim,)),
        "w_lin": u(ks[4], (out_dim, hidden_dim)),
        "b_lin": u(ks[5], (out_dim,)),
    }


if __name__ == "__main__":
    T, B, F = 8, 4, 16          # (time, batch, feat_dim)
    H, O = 32, 16               # hidden_dim, out_dim

    key = jax.random.PRNGKey(0)
    k_x, k_h, k_p = jax.random.split(key, 3)
    xs = jax.random.normal(k_x, (T, B, F), jnp.float32)
    h_0 = jax.random.normal(k_h, (1, B, H), jnp.float32)
    params = init_params(k_p, F, H, O)

    out, h_n = recurrent_forward(xs, h_0, params, include_h=True)
    out = jax.block_until_ready(out)
    h_n = jax.block_until_ready(h_n)

    ref_out, ref_h = _reference_forward(xs, h_0, params)
    assert out.shape == (T, B, O) and h_n.shape == (1, B, H)
    # Tolerance reflects bf16 MXU inputs (f32 accumulation) vs the f32 reference.
    assert jnp.allclose(out, ref_out, atol=5e-2, rtol=5e-2)
    assert jnp.allclose(h_n, ref_h, atol=5e-2, rtol=5e-2)

    print("KERNEL_OK")
</pallas_src>

<mosaic_0001>
module attributes {stable_mosaic.version = 11 : i64} {
  func.func @_recurrent_kernel(%arg0: memref<8x8x16xf32, #tpu.memory_space<vmem>>, %arg1: memref<8x32xf32, #tpu.memory_space<vmem>>, %arg2: memref<3x16x32xbf16, #tpu.memory_space<vmem>>, %arg3: memref<3x32x32xbf16, #tpu.memory_space<vmem>>, %arg4: memref<3x1x32xf32, #tpu.memory_space<vmem>>, %arg5: memref<3x1x32xf32, #tpu.memory_space<vmem>>, %arg6: memref<32x16xbf16, #tpu.memory_space<vmem>>, %arg7: memref<1x16xf32, #tpu.memory_space<vmem>>, %arg8: memref<8x8x16xf32, #tpu.memory_space<vmem>>, %arg9: memref<8x32xf32, #tpu.memory_space<vmem>>, %arg10: memref<64x32xf32, #tpu.memory_space<vmem>>) attributes {dimension_semantics = [], scalar_prefetch = 0 : i64, scratch_operands = 1 : i64, tpu.core_type = #tpu.core_type<tc>} {
    %c0 = arith.constant 0 : index
    %c0_0 = arith.constant 0 : index
    %c0_1 = arith.constant 0 : index
    %0 = vector.load %arg0[%c0, %c0_0, %c0_1] : memref<8x8x16xf32, #tpu.memory_space<vmem>>, vector<8x8x16xf32>
    %1 = vector.shape_cast %0 : vector<8x8x16xf32> to vector<64x16xf32>
    %2 = arith.truncf %1 : vector<64x16xf32> to vector<64x16xbf16>
    %c0_2 = arith.constant 0 : index
    %c0_3 = arith.constant 0 : index
    %c0_4 = arith.constant 0 : index
    %3 = vector.load %arg2[%c0_2, %c0_3, %c0_4] : memref<3x16x32xbf16, #tpu.memory_space<vmem>>, vector<1x16x32xbf16>
    %4 = vector.shape_cast %3 : vector<1x16x32xbf16> to vector<16x32xbf16>
    %cst = arith.constant dense<0.000000e+00> : vector<64x32xf32>
    %5 = tpu.matmul %2, %4, %cst {dimension_numbers = #tpu.dot_dimension_numbers<[1], [0], [0], [1], [0, 0, 1, 1], [], []>} : vector<64x16xbf16>, vector<16x32xbf16>, vector<64x32xf32> -> vector<64x32xf32>
    %c0_5 = arith.constant 0 : index
    %c0_6 = arith.constant 0 : index
    %c0_7 = arith.constant 0 : index
    %6 = vector.load %arg4[%c0_5, %c0_6, %c0_7] : memref<3x1x32xf32, #tpu.memory_space<vmem>>, vector<1x1x32xf32>
    %7 = vector.shape_cast %6 : vector<1x1x32xf32> to vector<1x32xf32>
    %8 = vector.broadcast %7 : vector<1x32xf32> to vector<64x32xf32>
    %9 = arith.addf %5, %8 : vector<64x32xf32>
    %c1 = arith.constant 1 : index
    %c0_8 = arith.constant 0 : index
    %c0_9 = arith.constant 0 : index
    %10 = vector.load %arg2[%c1, %c0_8, %c0_9] : memref<3x16x32xbf16, #tpu.memory_space<vmem>>, vector<1x16x32xbf16>
    %11 = vector.shape_cast %10 : vector<1x16x32xbf16> to vector<16x32xbf16>
    %cst_10 = arith.constant dense<0.000000e+00> : vector<64x32xf32>
    %12 = tpu.matmul %2, %11, %cst_10 {dimension_numbers = #tpu.dot_dimension_numbers<[1], [0], [0], [1], [0, 0, 1, 1], [], []>} : vector<64x16xbf16>, vector<16x32xbf16>, vector<64x32xf32> -> vector<64x32xf32>
    %c1_11 = arith.constant 1 : index
    %c0_12 = arith.constant 0 : index
    %c0_13 = arith.constant 0 : index
    %13 = vector.load %arg4[%c1_11, %c0_12, %c0_13] : memref<3x1x32xf32, #tpu.memory_space<vmem>>, vector<1x1x32xf32>
    %14 = vector.shape_cast %13 : vector<1x1x32xf32> to vector<1x32xf32>
    %15 = vector.broadcast %14 : vector<1x32xf32> to vector<64x32xf32>
    %16 = arith.addf %12, %15 : vector<64x32xf32>
    %c2 = arith.constant 2 : index
    %c0_14 = arith.constant 0 : index
    %c0_15 = arith.constant 0 : index
    %17 = vector.load %arg2[%c2, %c0_14, %c0_15] : memref<3x16x32xbf16, #tpu.memory_space<vmem>>, vector<1x16x32xbf16>
    %18 = vector.shape_cast %17 : vector<1x16x32xbf16> to vector<16x32xbf16>
    %cst_16 = arith.constant dense<0.000000e+00> : vector<64x32xf32>
    %19 = tpu.matmul %2, %18, %cst_16 {dimension_numbers = #tpu.dot_dimension_numbers<[1], [0], [0], [1], [0, 0, 1, 1], [], []>} : vector<64x16xbf16>, vector<16x32xbf16>, vector<64x32xf32> -> vector<64x32xf32>
    %c2_17 = arith.constant 2 : index
    %c0_18 = arith.constant 0 : index
    %c0_19 = arith.constant 0 : index
    %20 = vector.load %arg4[%c2_17, %c0_18, %c0_19] : memref<3x1x32xf32, #tpu.memory_space<vmem>>, vector<1x1x32xf32>
    %21 = vector.shape_cast %20 : vector<1x1x32xf32> to vector<1x32xf32>
    %22 = vector.broadcast %21 : vector<1x32xf32> to vector<64x32xf32>
    %23 = arith.addf %19, %22 : vector<64x32xf32>
    %c0_20 = arith.constant 0 : index
    %c0_21 = arith.constant 0 : index
    %c0_22 = arith.constant 0 : index
    %24 = vector.load %arg3[%c0_20, %c0_21, %c0_22] : memref<3x32x32xbf16, #tpu.memory_space<vmem>>, vector<1x32x32xbf16>
    %25 = vector.shape_cast %24 : vector<1x32x32xbf16> to vector<32x32xbf16>
    %c1_23 = arith.constant 1 : index
    %c0_24 = arith.constant 0 : index
    %c0_25 = arith.constant 0 : index
    %26 = vector.load %arg3[%c1_23, %c0_24, %c0_25] : memref<3x32x32xbf16, #tpu.memory_space<vmem>>, vector<1x32x32xbf16>
    %27 = vector.shape_cast %26 : vector<1x32x32xbf16> to vector<32x32xbf16>
    %c2_26 = arith.constant 2 : index
    %c0_27 = arith.constant 0 : index
    %c0_28 = arith.constant 0 : index
    %28 = vector.load %arg3[%c2_26, %c0_27, %c0_28] : memref<3x32x32xbf16, #tpu.memory_space<vmem>>, vector<1x32x32xbf16>
    %29 = vector.shape_cast %28 : vector<1x32x32xbf16> to vector<32x32xbf16>
    %c0_29 = arith.constant 0 : index
    %c0_30 = arith.constant 0 : index
    %c0_31 = arith.constant 0 : index
    %30 = vector.load %arg5[%c0_29, %c0_30, %c0_31] : memref<3x1x32xf32, #tpu.memory_space<vmem>>, vector<1x1x32xf32>
    %31 = vector.shape_cast %30 : vector<1x1x32xf32> to vector<1x32xf32>
    %c1_32 = arith.constant 1 : index
    %c0_33 = arith.constant 0 : index
    %c0_34 = arith.constant 0 : index
    %32 = vector.load %arg5[%c1_32, %c0_33, %c0_34] : memref<3x1x32xf32, #tpu.memory_space<vmem>>, vector<1x1x32xf32>
    %33 = vector.shape_cast %32 : vector<1x1x32xf32> to vector<1x32xf32>
    %c2_35 = arith.constant 2 : index
    %c0_36 = arith.constant 0 : index
    %c0_37 = arith.constant 0 : index
    %34 = vector.load %arg5[%c2_35, %c0_36, %c0_37] : memref<3x1x32xf32, #tpu.memory_space<vmem>>, vector<1x1x32xf32>
    %35 = vector.shape_cast %34 : vector<1x1x32xf32> to vector<1x32xf32>
    %c0_38 = arith.constant 0 : index
    %c0_39 = arith.constant 0 : index
    %36 = vector.load %arg1[%c0_38, %c0_39] : memref<8x32xf32, #tpu.memory_space<vmem>>, vector<8x32xf32>
    %37 = arith.truncf %36 : vector<8x32xf32> to vector<8x32xbf16>
    %cst_40 = arith.constant dense<0.000000e+00> : vector<8x32xf32>
    %38 = tpu.matmul %37, %25, %cst_40 {dimension_numbers = #tpu.dot_dimension_numbers<[1], [0], [0], [1], [0, 0, 1, 1], [], []>} : vector<8x32xbf16>, vector<32x32xbf16>, vector<8x32xf32> -> vector<8x32xf32>
    %39 = vector.broadcast %31 : vector<1x32xf32> to vector<8x32xf32>
    %40 = arith.addf %38, %39 : vector<8x32xf32>
    %cst_41 = arith.constant dense<0.000000e+00> : vector<8x32xf32>
    %41 = tpu.matmul %37, %27, %cst_41 {dimension_numbers = #tpu.dot_dimension_numbers<[1], [0], [0], [1], [0, 0, 1, 1], [], []>} : vector<8x32xbf16>, vector<32x32xbf16>, vector<8x32xf32> -> vector<8x32xf32>
    %42 = vector.broadcast %33 : vector<1x32xf32> to vector<8x32xf32>
    %43 = arith.addf %41, %42 : vector<8x32xf32>
    %cst_42 = arith.constant dense<0.000000e+00> : vector<8x32xf32>
    %44 = tpu.matmul %37, %29, %cst_42 {dimension_numbers = #tpu.dot_dimension_numbers<[1], [0], [0], [1], [0, 0, 1, 1], [], []>} : vector<8x32xbf16>, vector<32x32xbf16>, vector<8x32xf32> -> vector<8x32xf32>
    %45 = vector.broadcast %35 : vector<1x32xf32> to vector<8x32xf32>
    %46 = arith.addf %44, %45 : vector<8x32xf32>
    %47 = vector.extract_strided_slice %9 {offsets = [0, 0], sizes = [8, 32], strides = [1, 1]} : vector<64x32xf32> to vector<8x32xf32>
    %48 = arith.addf %47, %40 : vector<8x32xf32>
    %49 = arith.negf %48 : vector<8x32xf32>
    %50 = math.exp %49 : vector<8x32xf32>
    %cst_43 = arith.constant 1.000000e+00 : f32
    %51 = vector.broadcast %cst_43 : f32 to vector<8x32xf32>
    %52 = arith.addf %51, %50 : vector<8x32xf32>
    %53 = arith.divf %51, %52 : vector<8x32xf32>
    %54 = vector.extract_strided_slice %16 {offsets = [0, 0], sizes = [8, 32], strides = [1, 1]} : vector<64x32xf32> to vector<8x32xf32>
    %55 = arith.addf %54, %43 : vector<8x32xf32>
    %56 = arith.negf %55 : vector<8x32xf32>
    %57 = math.exp %56 : vector<8x32xf32>
    %cst_44 = arith.constant 1.000000e+00 : f32
    %58 = vector.broadcast %cst_44 : f32 to vector<8x32xf32>
    %59 = arith.addf %58, %57 : vector<8x32xf32>
    %60 = arith.divf %58, %59 : vector<8x32xf32>
    %61 = vector.extract_strided_slice %23 {offsets = [0, 0], sizes = [8, 32], strides = [1, 1]} : vector<64x32xf32> to vector<8x32xf32>
    %62 = arith.mulf %53, %46 : vector<8x32xf32>
    %63 = arith.addf %61, %62 : vector<8x32xf32>
    %64 = math.tanh %63 : vector<8x32xf32>
    %cst_45 = arith.constant 1.000000e+00 : f32
    %65 = vector.broadcast %cst_45 : f32 to vector<8x32xf32>
    %66 = arith.subf %65, %60 : vector<8x32xf32>
    %67 = arith.mulf %66, %64 : vector<8x32xf32>
    %68 = arith.mulf %60, %36 : vector<8x32xf32>
    %69 = arith.addf %67, %68 : vector<8x32xf32>
    %c0_46 = arith.constant 0 : index
    %c0_47 = arith.constant 0 : index
    %70 = vector.load %arg10[%c0_46, %c0_47] : memref<64x32xf32, #tpu.memory_space<vmem>>, vector<8x32xf32>
    tpu.vector_store %arg10[%c0_46, %c0_47], %69 {strides = array<i32>} : memref<64x32xf32, #tpu.memory_space<vmem>>, vector<8x32xf32>,
    %71 = arith.truncf %69 : vector<8x32xf32> to vector<8x32xbf16>
    %cst_48 = arith.constant dense<0.000000e+00> : vector<8x32xf32>
    %72 = tpu.matmul %71, %25, %cst_48 {dimension_numbers = #tpu.dot_dimension_numbers<[1], [0], [0], [1], [0, 0, 1, 1], [], []>} : vector<8x32xbf16>, vector<32x32xbf16>, vector<8x32xf32> -> vector<8x32xf32>
    %73 = vector.broadcast %31 : vector<1x32xf32> to vector<8x32xf32>
    %74 = arith.addf %72, %73 : vector<8x32xf32>
    %cst_49 = arith.constant dense<0.000000e+00> : vector<8x32xf32>
    %75 = tpu.matmul %71, %27, %cst_49 {dimension_numbers = #tpu.dot_dimension_numbers<[1], [0], [0], [1], [0, 0, 1, 1], [], []>} : vector<8x32xbf16>, vector<32x32xbf16>, vector<8x32xf32> -> vector<8x32xf32>
    %76 = vector.broadcast %33 : vector<1x32xf32> to vector<8x32xf32>
    %77 = arith.addf %75, %76 : vector<8x32xf32>
    %cst_50 = arith.constant dense<0.000000e+00> : vector<8x32xf32>
    %78 = tpu.matmul %71, %29, %cst_50 {dimension_numbers = #tpu.dot_dimension_numbers<[1], [0], [0], [1], [0, 0, 1, 1], [], []>} : vector<8x32xbf16>, vector<32x32xbf16>, vector<8x32xf32> -> vector<8x32xf32>
    %79 = vector.broadcast %35 : vector<1x32xf32> to vector<8x32xf32>
    %80 = arith.addf %78, %79 : vector<8x32xf32>
    %81 = vector.extract_strided_slice %9 {offsets = [8, 0], sizes = [8, 32], strides = [1, 1]} : vector<64x32xf32> to vector<8x32xf32>
    %82 = arith.addf %81, %74 : vector<8x32xf32>
    %83 = arith.negf %82 : vector<8x32xf32>
    %84 = math.exp %83 : vector<8x32xf32>
    %cst_51 = arith.constant 1.000000e+00 : f32
    %85 = vector.broadcast %cst_51 : f32 to vector<8x32xf32>
    %86 = arith.addf %85, %84 : vector<8x32xf32>
    %87 = arith.divf %85, %86 : vector<8x32xf32>
    %88 = vector.extract_strided_slice %16 {offsets = [8, 0], sizes = [8, 32], strides = [1, 1]} : vector<64x32xf32> to vector<8x32xf32>
    %89 = arith.addf %88, %77 : vector<8x32xf32>
    %90 = arith.negf %89 : vector<8x32xf32>
    %91 = math.exp %90 : vector<8x32xf32>
    %cst_52 = arith.constant 1.000000e+00 : f32
    %92 = vector.broadcast %cst_52 : f32 to vector<8x32xf32>
    %93 = arith.addf %92, %91 : vector<8x32xf32>
    %94 = arith.divf %92, %93 : vector<8x32xf32>
    %95 = vector.extract_strided_slice %23 {offsets = [8, 0], sizes = [8, 32], strides = [1, 1]} : vector<64x32xf32> to vector<8x32xf32>
    %96 = arith.mulf %87, %80 : vector<8x32xf32>
    %97 = arith.addf %95, %96 : vector<8x32xf32>
    %98 = math.tanh %97 : vector<8x32xf32>
    %cst_53 = arith.constant 1.000000e+00 : f32
    %99 = vector.broadcast %cst_53 : f32 to vector<8x32xf32>
    %100 = arith.subf %99, %94 : vector<8x32xf32>
    %101 = arith.mulf %100, %98 : vector<8x32xf32>
    %102 = arith.mulf %94, %69 : vector<8x32xf32>
    %103 = arith.addf %101, %102 : vector<8x32xf32>
    %c8 = arith.constant 8 : index
    %c0_54 = arith.constant 0 : index
    %104 = vector.load %arg10[%c8, %c0_54] : memref<64x32xf32, #tpu.memory_space<vmem>>, vector<8x32xf32>
    tpu.vector_store %arg10[%c8, %c0_54], %103 {strides = array<i32>} : memref<64x32xf32, #tpu.memory_space<vmem>>, vector<8x32xf32>,
    %105 = arith.truncf %103 : vector<8x32xf32> to vector<8x32xbf16>
    %cst_55 = arith.constant dense<0.000000e+00> : vector<8x32xf32>
    %106 = tpu.matmul %105, %25, %cst_55 {dimension_numbers = #tpu.dot_dimension_numbers<[1], [0], [0], [1], [0, 0, 1, 1], [], []>} : vector<8x32xbf16>, vector<32x32xbf16>, vector<8x32xf32> -> vector<8x32xf32>
    %107 = vector.broadcast %31 : vector<1x32xf32> to vector<8x32xf32>
    %108 = arith.addf %106, %107 : vector<8x32xf32>
    %cst_56 = arith.constant dense<0.000000e+00> : vector<8x32xf32>
    %109 = tpu.matmul %105, %27, %cst_56 {dimension_numbers = #tpu.dot_dimension_numbers<[1], [0], [0], [1], [0, 0, 1, 1], [], []>} : vector<8x32xbf16>, vector<32x32xbf16>, vector<8x32xf32> -> vector<8x32xf32>
    %110 = vector.broadcast %33 : vector<1x32xf32> to vector<8x32xf32>
    %111 = arith.addf %109, %110 : vector<8x32xf32>
    %cst_57 = arith.constant dense<0.000000e+00> : vector<8x32xf32>
    %112 = tpu.matmul %105, %29, %cst_57 {dimension_numbers = #tpu.dot_dimension_numbers<[1], [0], [0], [1], [0, 0, 1, 1], [], []>} : vector<8x32xbf16>, vector<32x32xbf16>, vector<8x32xf32> -> vector<8x32xf32>
    %113 = vector.broadcast %35 : vector<1x32xf32> to vector<8x32xf32>
    %114 = arith.addf %112, %113 : vector<8x32xf32>
    %115 = vector.extract_strided_slice %9 {offsets = [16, 0], sizes = [8, 32], strides = [1, 1]} : vector<64x32xf32> to vector<8x32xf32>
    %116 = arith.addf %115, %108 : vector<8x32xf32>
    %117 = arith.negf %116 : vector<8x32xf32>
    %118 = math.exp %117 : vector<8x32xf32>
    %cst_58 = arith.constant 1.000000e+00 : f32
    %119 = vector.broadcast %cst_58 : f32 to vector<8x32xf32>
    %120 = arith.addf %119, %118 : vector<8x32xf32>
    %121 = arith.divf %119, %120 : vector<8x32xf32>
    %122 = vector.extract_strided_slice %16 {offsets = [16, 0], sizes = [8, 32], strides = [1, 1]} : vector<64x32xf32> to vector<8x32xf32>
    %123 = arith.addf %122, %111 : vector<8x32xf32>
    %124 = arith.negf %123 : vector<8x32xf32>
    %125 = math.exp %124 : vector<8x32xf32>
    %cst_59 = arith.constant 1.000000e+00 : f32
    %126 = vector.broadcast %cst_59 : f32 to vector<8x32xf32>
    %127 = arith.addf %126, %125 : vector<8x32xf32>
    %128 = arith.divf %126, %127 : vector<8x32xf32>
    %129 = vector.extract_strided_slice %23 {offsets = [16, 0], sizes = [8, 32], strides = [1, 1]} : vector<64x32xf32> to vector<8x32xf32>
    %130 = arith.mulf %121, %114 : vector<8x32xf32>
    %131 = arith.addf %129, %130 : vector<8x32xf32>
    %132 = math.tanh %131 : vector<8x32xf32>
    %cst_60 = arith.constant 1.000000e+00 : f32
    %133 = vector.broadcast %cst_60 : f32 to vector<8x32xf32>
    %134 = arith.subf %133, %128 : vector<8x32xf32>
    %135 = arith.mulf %134, %132 : vector<8x32xf32>
    %136 = arith.mulf %128, %103 : vector<8x32xf32>
    %137 = arith.addf %135, %136 : vector<8x32xf32>
    %c16 = arith.constant 16 : index
    %c0_61 = arith.constant 0 : index
    %138 = vector.load %arg10[%c16, %c0_61] : memref<64x32xf32, #tpu.memory_space<vmem>>, vector<8x32xf32>
    tpu.vector_store %arg10[%c16, %c0_61], %137 {strides = array<i32>} : memref<64x32xf32, #tpu.memory_space<vmem>>, vector<8x32xf32>,
    %139 = arith.truncf %137 : vector<8x32xf32> to vector<8x32xbf16>
    %cst_62 = arith.constant dense<0.000000e+00> : vector<8x32xf32>
    %140 = tpu.matmul %139, %25, %cst_62 {dimension_numbers = #tpu.dot_dimension_numbers<[1], [0], [0], [1], [0, 0, 1, 1], [], []>} : vector<8x32xbf16>, vector<32x32xbf16>, vector<8x32xf32> -> vector<8x32xf32>
    %141 = vector.broadcast %31 : vector<1x32xf32> to vector<8x32xf32>
    %142 = arith.addf %140, %141 : vector<8x32xf32>
    %cst_63 = arith.constant dense<0.000000e+00> : vector<8x32xf32>
    %143 = tpu.matmul %139, %27, %cst_63 {dimension_numbers = #tpu.dot_dimension_numbers<[1], [0], [0], [1], [0, 0, 1, 1], [], []>} : vector<8x32xbf16>, vector<32x32xbf16>, vector<8x32xf32> -> vector<8x32xf32>
    %144 = vector.broadcast %33 : vector<1x32xf32> to vector<8x32xf32>
    %145 = arith.addf %143, %144 : vector<8x32xf32>
    %cst_64 = arith.constant dense<0.000000e+00> : vector<8x32xf32>
    %146 = tpu.matmul %139, %29, %cst_64 {dimension_numbers = #tpu.dot_dimension_numbers<[1], [0], [0], [1], [0, 0, 1, 1], [], []>} : vector<8x32xbf16>, vector<32x32xbf16>, vector<8x32xf32> -> vector<8x32xf32>
    %147 = vector.broadcast %35 : vector<1x32xf32> to vector<8x32xf32>
    %148 = arith.addf %146, %147 : vector<8x32xf32>
    %149 = vector.extract_strided_slice %9 {offsets = [24, 0], sizes = [8, 32], strides = [1, 1]} : vector<64x32xf32> to vector<8x32xf32>
    %150 = arith.addf %149, %142 : vector<8x32xf32>
    %151 = arith.negf %150 : vector<8x32xf32>
    %152 = math.exp %151 : vector<8x32xf32>
    %cst_65 = arith.constant 1.000000e+00 : f32
    %153 = vector.broadcast %cst_65 : f32 to vector<8x32xf32>
    %154 = arith.addf %153, %152 : vector<8x32xf32>
    %155 = arith.divf %153, %154 : vector<8x32xf32>
    %156 = vector.extract_strided_slice %16 {offsets = [24, 0], sizes = [8, 32], strides = [1, 1]} : vector<64x32xf32> to vector<8x32xf32>
    %157 = arith.addf %156, %145 : vector<8x32xf32>
    %158 = arith.negf %157 : vector<8x32xf32>
    %159 = math.exp %158 : vector<8x32xf32>
    %cst_66 = arith.constant 1.000000e+00 : f32
    %160 = vector.broadcast %cst_66 : f32 to vector<8x32xf32>
    %161 = arith.addf %160, %159 : vector<8x32xf32>
    %162 = arith.divf %160, %161 : vector<8x32xf32>
    %163 = vector.extract_strided_slice %23 {offsets = [24, 0], sizes = [8, 32], strides = [1, 1]} : vector<64x32xf32> to vector<8x32xf32>
    %164 = arith.mulf %155, %148 : vector<8x32xf32>
    %165 = arith.addf %163, %164 : vector<8x32xf32>
    %166 = math.tanh %165 : vector<8x32xf32>
    %cst_67 = arith.constant 1.000000e+00 : f32
    %167 = vector.broadcast %cst_67 : f32 to vector<8x32xf32>
    %168 = arith.subf %167, %162 : vector<8x32xf32>
    %169 = arith.mulf %168, %166 : vector<8x32xf32>
    %170 = arith.mulf %162, %137 : vector<8x32xf32>
    %171 = arith.addf %169, %170 : vector<8x32xf32>
    %c24 = arith.constant 24 : index
    %c0_68 = arith.constant 0 : index
    %172 = vector.load %arg10[%c24, %c0_68] : memref<64x32xf32, #tpu.memory_space<vmem>>, vector<8x32xf32>
    tpu.vector_store %arg10[%c24, %c0_68], %171 {strides = array<i32>} : memref<64x32xf32, #tpu.memory_space<vmem>>, vector<8x32xf32>,
    %173 = arith.truncf %171 : vector<8x32xf32> to vector<8x32xbf16>
    %cst_69 = arith.constant dense<0.000000e+00> : vector<8x32xf32>
    %174 = tpu.matmul %173, %25, %cst_69 {dimension_numbers = #tpu.dot_dimension_numbers<[1], [0], [0], [1], [0, 0, 1, 1], [], []>} : vector<8x32xbf16>, vector<32x32xbf16>, vector<8x32xf32> -> vector<8x32xf32>
    %175 = vector.broadcast %31 : vector<1x32xf32> to vector<8x32xf32>
    %176 = arith.addf %174, %175 : vector<8x32xf32>
    %cst_70 = arith.constant dense<0.000000e+00> : vector<8x32xf32>
    %177 = tpu.matmul %173, %27, %cst_70 {dimension_numbers = #tpu.dot_dimension_numbers<[1], [0], [0], [1], [0, 0, 1, 1], [], []>} : vector<8x32xbf16>, vector<32x32xbf16>, vector<8x32xf32> -> vector<8x32xf32>
    %178 = vector.broadcast %33 : vector<1x32xf32> to vector<8x32xf32>
    %179 = arith.addf %177, %178 : vector<8x32xf32>
    %cst_71 = arith.constant dense<0.000000e+00> : vector<8x32xf32>
    %180 = tpu.matmul %173, %29, %cst_71 {dimension_numbers = #tpu.dot_dimension_numbers<[1], [0], [0], [1], [0, 0, 1, 1], [], []>} : vector<8x32xbf16>, vector<32x32xbf16>, vector<8x32xf32> -> vector<8x32xf32>
    %181 = vector.broadcast %35 : vector<1x32xf32> to vector<8x32xf32>
    %182 = arith.addf %180, %181 : vector<8x32xf32>
    %183 = vector.extract_strided_slice %9 {offsets = [32, 0], sizes = [8, 32], strides = [1, 1]} : vector<64x32xf32> to vector<8x32xf32>
    %184 = arith.addf %183, %176 : vector<8x32xf32>
    %185 = arith.negf %184 : vector<8x32xf32>
    %186 = math.exp %185 : vector<8x32xf32>
    %cst_72 = arith.constant 1.000000e+00 : f32
    %187 = vector.broadcast %cst_72 : f32 to vector<8x32xf32>
    %188 = arith.addf %187, %186 : vector<8x32xf32>
    %189 = arith.divf %187, %188 : vector<8x32xf32>
    %190 = vector.extract_strided_slice %16 {offsets = [32, 0], sizes = [8, 32], strides = [1, 1]} : vector<64x32xf32> to vector<8x32xf32>
    %191 = arith.addf %190, %179 : vector<8x32xf32>
    %192 = arith.negf %191 : vector<8x32xf32>
    %193 = math.exp %192 : vector<8x32xf32>
    %cst_73 = arith.constant 1.000000e+00 : f32
    %194 = vector.broadcast %cst_73 : f32 to vector<8x32xf32>
    %195 = arith.addf %194, %193 : vector<8x32xf32>
    %196 = arith.divf %194, %195 : vector<8x32xf32>
    %197 = vector.extract_strided_slice %23 {offsets = [32, 0], sizes = [8, 32], strides = [1, 1]} : vector<64x32xf32> to vector<8x32xf32>
    %198 = arith.mulf %189, %182 : vector<8x32xf32>
    %199 = arith.addf %197, %198 : vector<8x32xf32>
    %200 = math.tanh %199 : vector<8x32xf32>
    %cst_74 = arith.constant 1.000000e+00 : f32
    %201 = vector.broadcast %cst_74 : f32 to vector<8x32xf32>
    %202 = arith.subf %201, %196 : vector<8x32xf32>
    %203 = arith.mulf %202, %200 : vector<8x32xf32>
    %204 = arith.mulf %196, %171 : vector<8x32xf32>
    %205 = arith.addf %203, %204 : vector<8x32xf32>
    %c32 = arith.constant 32 : index
    %c0_75 = arith.constant 0 : index
    %206 = vector.load %arg10[%c32, %c0_75] : memref<64x32xf32, #tpu.memory_space<vmem>>, vector<8x32xf32>
    tpu.vector_store %arg10[%c32, %c0_75], %205 {strides = array<i32>} : memref<64x32xf32, #tpu.memory_space<vmem>>, vector<8x32xf32>,
    %207 = arith.truncf %205 : vector<8x32xf32> to vector<8x32xbf16>
    %cst_76 = arith.constant dense<0.000000e+00> : vector<8x32xf32>
    %208 = tpu.matmul %207, %25, %cst_76 {dimension_numbers = #tpu.dot_dimension_numbers<[1], [0], [0], [1], [0, 0, 1, 1], [], []>} : vector<8x32xbf16>, vector<32x32xbf16>, vector<8x32xf32> -> vector<8x32xf32>
    %209 = vector.broadcast %31 : vector<1x32xf32> to vector<8x32xf32>
    %210 = arith.addf %208, %209 : vector<8x32xf32>
    %cst_77 = arith.constant dense<0.000000e+00> : vector<8x32xf32>
    %211 = tpu.matmul %207, %27, %cst_77 {dimension_numbers = #tpu.dot_dimension_numbers<[1], [0], [0], [1], [0, 0, 1, 1], [], []>} : vector<8x32xbf16>, vector<32x32xbf16>, vector<8x32xf32> -> vector<8x32xf32>
    %212 = vector.broadcast %33 : vector<1x32xf32> to vector<8x32xf32>
    %213 = arith.addf %211, %212 : vector<8x32xf32>
    %cst_78 = arith.constant dense<0.000000e+00> : vector<8x32xf32>
    %214 = tpu.matmul %207, %29, %cst_78 {dimension_numbers = #tpu.dot_dimension_numbers<[1], [0], [0], [1], [0, 0, 1, 1], [], []>} : vector<8x32xbf16>, vector<32x32xbf16>, vector<8x32xf32> -> vector<8x32xf32>
    %215 = vector.broadcast %35 : vector<1x32xf32> to vector<8x32xf32>
    %216 = arith.addf %214, %215 : vector<8x32xf32>
    %217 = vector.extract_strided_slice %9 {offsets = [40, 0], sizes = [8, 32], strides = [1, 1]} : vector<64x32xf32> to vector<8x32xf32>
    %218 = arith.addf %217, %210 : vector<8x32xf32>
    %219 = arith.negf %218 : vector<8x32xf32>
    %220 = math.exp %219 : vector<8x32xf32>
    %cst_79 = arith.constant 1.000000e+00 : f32
    %221 = vector.broadcast %cst_79 : f32 to vector<8x32xf32>
    %222 = arith.addf %221, %220 : vector<8x32xf32>
    %223 = arith.divf %221, %222 : vector<8x32xf32>
    %224 = vector.extract_strided_slice %16 {offsets = [40, 0], sizes = [8, 32], strides = [1, 1]} : vector<64x32xf32> to vector<8x32xf32>
    %225 = arith.addf %224, %213 : vector<8x32xf32>
    %226 = arith.negf %225 : vector<8x32xf32>
    %227 = math.exp %226 : vector<8x32xf32>
    %cst_80 = arith.constant 1.000000e+00 : f32
    %228 = vector.broadcast %cst_80 : f32 to vector<8x32xf32>
    %229 = arith.addf %228, %227 : vector<8x32xf32>
    %230 = arith.divf %228, %229 : vector<8x32xf32>
    %231 = vector.extract_strided_slice %23 {offsets = [40, 0], sizes = [8, 32], strides = [1, 1]} : vector<64x32xf32> to vector<8x32xf32>
    %232 = arith.mulf %223, %216 : vector<8x32xf32>
    %233 = arith.addf %231, %232 : vector<8x32xf32>
    %234 = math.tanh %233 : vector<8x32xf32>
    %cst_81 = arith.constant 1.000000e+00 : f32
    %235 = vector.broadcast %cst_81 : f32 to vector<8x32xf32>
    %236 = arith.subf %235, %230 : vector<8x32xf32>
    %237 = arith.mulf %236, %234 : vector<8x32xf32>
    %238 = arith.mulf %230, %205 : vector<8x32xf32>
    %239 = arith.addf %237, %238 : vector<8x32xf32>
    %c40 = arith.constant 40 : index
    %c0_82 = arith.constant 0 : index
    %240 = vector.load %arg10[%c40, %c0_82] : memref<64x32xf32, #tpu.memory_space<vmem>>, vector<8x32xf32>
    tpu.vector_store %arg10[%c40, %c0_82], %239 {strides = array<i32>} : memref<64x32xf32, #tpu.memory_space<vmem>>, vector<8x32xf32>,
    %241 = arith.truncf %239 : vector<8x32xf32> to vector<8x32xbf16>
    %cst_83 = arith.constant dense<0.000000e+00> : vector<8x32xf32>
    %242 = tpu.matmul %241, %25, %cst_83 {dimension_numbers = #tpu.dot_dimension_numbers<[1], [0], [0], [1], [0, 0, 1, 1], [], []>} : vector<8x32xbf16>, vector<32x32xbf16>, vector<8x32xf32> -> vector<8x32xf32>
    %243 = vector.broadcast %31 : vector<1x32xf32> to vector<8x32xf32>
    %244 = arith.addf %242, %243 : vector<8x32xf32>
    %cst_84 = arith.constant dense<0.000000e+00> : vector<8x32xf32>
    %245 = tpu.matmul %241, %27, %cst_84 {dimension_numbers = #tpu.dot_dimension_numbers<[1], [0], [0], [1], [0, 0, 1, 1], [], []>} : vector<8x32xbf16>, vector<32x32xbf16>, vector<8x32xf32> -> vector<8x32xf32>
    %246 = vector.broadcast %33 : vector<1x32xf32> to vector<8x32xf32>
    %247 = arith.addf %245, %246 : vector<8x32xf32>
    %cst_85 = arith.constant dense<0.000000e+00> : vector<8x32xf32>
    %248 = tpu.matmul %241, %29, %cst_85 {dimension_numbers = #tpu.dot_dimension_numbers<[1], [0], [0], [1], [0, 0, 1, 1], [], []>} : vector<8x32xbf16>, vector<32x32xbf16>, vector<8x32xf32> -> vector<8x32xf32>
    %249 = vector.broadcast %35 : vector<1x32xf32> to vector<8x32xf32>
    %250 = arith.addf %248, %249 : vector<8x32xf32>
    %251 = vector.extract_strided_slice %9 {offsets = [48, 0], sizes = [8, 32], strides = [1, 1]} : vector<64x32xf32> to vector<8x32xf32>
    %252 = arith.addf %251, %244 : vector<8x32xf32>
    %253 = arith.negf %252 : vector<8x32xf32>
    %254 = math.exp %253 : vector<8x32xf32>
    %cst_86 = arith.constant 1.000000e+00 : f32
    %255 = vector.broadcast %cst_86 : f32 to vector<8x32xf32>
    %256 = arith.addf %255, %254 : vector<8x32xf32>
    %257 = arith.divf %255, %256 : vector<8x32xf32>
    %258 = vector.extract_strided_slice %16 {offsets = [48, 0], sizes = [8, 32], strides = [1, 1]} : vector<64x32xf32> to vector<8x32xf32>
    %259 = arith.addf %258, %247 : vector<8x32xf32>
    %260 = arith.negf %259 : vector<8x32xf32>
    %261 = math.exp %260 : vector<8x32xf32>
    %cst_87 = arith.constant 1.000000e+00 : f32
    %262 = vector.broadcast %cst_87 : f32 to vector<8x32xf32>
    %263 = arith.addf %262, %261 : vector<8x32xf32>
    %264 = arith.divf %262, %263 : vector<8x32xf32>
    %265 = vector.extract_strided_slice %23 {offsets = [48, 0], sizes = [8, 32], strides = [1, 1]} : vector<64x32xf32> to vector<8x32xf32>
    %266 = arith.mulf %257, %250 : vector<8x32xf32>
    %267 = arith.addf %265, %266 : vector<8x32xf32>
    %268 = math.tanh %267 : vector<8x32xf32>
    %cst_88 = arith.constant 1.000000e+00 : f32
    %269 = vector.broadcast %cst_88 : f32 to vector<8x32xf32>
    %270 = arith.subf %269, %264 : vector<8x32xf32>
    %271 = arith.mulf %270, %268 : vector<8x32xf32>
    %272 = arith.mulf %264, %239 : vector<8x32xf32>
    %273 = arith.addf %271, %272 : vector<8x32xf32>
    %c48 = arith.constant 48 : index
    %c0_89 = arith.constant 0 : index
    %274 = vector.load %arg10[%c48, %c0_89] : memref<64x32xf32, #tpu.memory_space<vmem>>, vector<8x32xf32>
    tpu.vector_store %arg10[%c48, %c0_89], %273 {strides = array<i32>} : memref<64x32xf32, #tpu.memory_space<vmem>>, vector<8x32xf32>,
    %275 = arith.truncf %273 : vector<8x32xf32> to vector<8x32xbf16>
    %cst_90 = arith.constant dense<0.000000e+00> : vector<8x32xf32>
    %276 = tpu.matmul %275, %25, %cst_90 {dimension_numbers = #tpu.dot_dimension_numbers<[1], [0], [0], [1], [0, 0, 1, 1], [], []>} : vector<8x32xbf16>, vector<32x32xbf16>, vector<8x32xf32> -> vector<8x32xf32>
    %277 = vector.broadcast %31 : vector<1x32xf32> to vector<8x32xf32>
    %278 = arith.addf %276, %277 : vector<8x32xf32>
    %cst_91 = arith.constant dense<0.000000e+00> : vector<8x32xf32>
    %279 = tpu.matmul %275, %27, %cst_91 {dimension_numbers = #tpu.dot_dimension_numbers<[1], [0], [0], [1], [0, 0, 1, 1], [], []>} : vector<8x32xbf16>, vector<32x32xbf16>, vector<8x32xf32> -> vector<8x32xf32>
    %280 = vector.broadcast %33 : vector<1x32xf32> to vector<8x32xf32>
    %281 = arith.addf %279, %280 : vector<8x32xf32>
    %cst_92 = arith.constant dense<0.000000e+00> : vector<8x32xf32>
    %282 = tpu.matmul %275, %29, %cst_92 {dimension_numbers = #tpu.dot_dimension_numbers<[1], [0], [0], [1], [0, 0, 1, 1], [], []>} : vector<8x32xbf16>, vector<32x32xbf16>, vector<8x32xf32> -> vector<8x32xf32>
    %283 = vector.broadcast %35 : vector<1x32xf32> to vector<8x32xf32>
    %284 = arith.addf %282, %283 : vector<8x32xf32>
    %285 = vector.extract_strided_slice %9 {offsets = [56, 0], sizes = [8, 32], strides = [1, 1]} : vector<64x32xf32> to vector<8x32xf32>
    %286 = arith.addf %285, %278 : vector<8x32xf32>
    %287 = arith.negf %286 : vector<8x32xf32>
    %288 = math.exp %287 : vector<8x32xf32>
    %cst_93 = arith.constant 1.000000e+00 : f32
    %289 = vector.broadcast %cst_93 : f32 to vector<8x32xf32>
    %290 = arith.addf %289, %288 : vector<8x32xf32>
    %291 = arith.divf %289, %290 : vector<8x32xf32>
    %292 = vector.extract_strided_slice %16 {offsets = [56, 0], sizes = [8, 32], strides = [1, 1]} : vector<64x32xf32> to vector<8x32xf32>
    %293 = arith.addf %292, %281 : vector<8x32xf32>
    %294 = arith.negf %293 : vector<8x32xf32>
    %295 = math.exp %294 : vector<8x32xf32>
    %cst_94 = arith.constant 1.000000e+00 : f32
    %296 = vector.broadcast %cst_94 : f32 to vector<8x32xf32>
    %297 = arith.addf %296, %295 : vector<8x32xf32>
    %298 = arith.divf %296, %297 : vector<8x32xf32>
    %299 = vector.extract_strided_slice %23 {offsets = [56, 0], sizes = [8, 32], strides = [1, 1]} : vector<64x32xf32> to vector<8x32xf32>
    %300 = arith.mulf %291, %284 : vector<8x32xf32>
    %301 = arith.addf %299, %300 : vector<8x32xf32>
    %302 = math.tanh %301 : vector<8x32xf32>
    %cst_95 = arith.constant 1.000000e+00 : f32
    %303 = vector.broadcast %cst_95 : f32 to vector<8x32xf32>
    %304 = arith.subf %303, %298 : vector<8x32xf32>
    %305 = arith.mulf %304, %302 : vector<8x32xf32>
    %306 = arith.mulf %298, %273 : vector<8x32xf32>
    %307 = arith.addf %305, %306 : vector<8x32xf32>
    %c56 = arith.constant 56 : index
    %c0_96 = arith.constant 0 : index
    %308 = vector.load %arg10[%c56, %c0_96] : memref<64x32xf32, #tpu.memory_space<vmem>>, vector<8x32xf32>
    tpu.vector_store %arg10[%c56, %c0_96], %307 {strides = array<i32>} : memref<64x32xf32, #tpu.memory_space<vmem>>, vector<8x32xf32>,
    %c0_97 = arith.constant 0 : index
    %c0_98 = arith.constant 0 : index
    %309 = vector.load %arg9[%c0_97, %c0_98] : memref<8x32xf32, #tpu.memory_space<vmem>>, vector<8x32xf32>
    tpu.vector_store %arg9[%c0_97, %c0_98], %307 {strides = array<i32>} : memref<8x32xf32, #tpu.memory_space<vmem>>, vector<8x32xf32>,
    %c0_99 = arith.constant 0 : index
    %c0_100 = arith.constant 0 : index
    %310 = vector.load %arg10[%c0_99, %c0_100] : memref<64x32xf32, #tpu.memory_space<vmem>>, vector<64x32xf32>
    %311 = arith.truncf %310 : vector<64x32xf32> to vector<64x32xbf16>
    %c0_101 = arith.constant 0 : index
    %c0_102 = arith.constant 0 : index
    %312 = vector.load %arg6[%c0_101, %c0_102] : memref<32x16xbf16, #tpu.memory_space<vmem>>, vector<32x16xbf16>
    %cst_103 = arith.constant dense<0.000000e+00> : vector<64x16xf32>
    %313 = tpu.matmul %311, %312, %cst_103 {dimension_numbers = #tpu.dot_dimension_numbers<[1], [0], [0], [1], [0, 0, 1, 1], [], []>} : vector<64x32xbf16>, vector<32x16xbf16>, vector<64x16xf32> -> vector<64x16xf32>
    %c0_104 = arith.constant 0 : index
    %c0_105 = arith.constant 0 : index
    %314 = vector.load %arg7[%c0_104, %c0_105] : memref<1x16xf32, #tpu.memory_space<vmem>>, vector<1x16xf32>
    %315 = vector.broadcast %314 : vector<1x16xf32> to vector<64x16xf32>
    %316 = arith.addf %313, %315 : vector<64x16xf32>
    %317 = vector.shape_cast %316 : vector<64x16xf32> to vector<8x8x16xf32>
    %c0_106 = arith.constant 0 : index
    %c0_107 = arith.constant 0 : index
    %c0_108 = arith.constant 0 : index
    %318 = vector.load %arg8[%c0_106, %c0_107, %c0_108] : memref<8x8x16xf32, #tpu.memory_space<vmem>>, vector<8x8x16xf32>
    tpu.vector_store %arg8[%c0_106, %c0_107, %c0_108], %317 {strides = array<i32>} : memref<8x8x16xf32, #tpu.memory_space<vmem>>, vector<8x8x16xf32>,
    return
  }
}

</mosaic_0001>

<llo_original>
// kernel: recurrent_forward.1
$region0: #{recurrent_forward.1}
  #allocation0 [shape = 'u32[]', space=smem, size = 0x4, offset = 0x4, fixed_abs, tag = 'smem constant byte address 0x4 - core index']
  #allocation1 [shape = 'u32[144,128]{1,0:T(1,128)}', space=vmem, size = 0x12000, scoped, tag = 'internal scratch']
  #allocation2 [shape = 'f32[64,32]{1,0:T(8,128)}', space=vmem, size = 0x8000, scoped, tag = 'scratch operand']
  %s0 = inlined_call_operand.vmem [shape: f32[8,8,16], index: 0, kind: input, shape index: {}]
  %s1 = inlined_call_operand.vmem [shape: f32[8,32], index: 1, kind: input, shape index: {}]
  %s2 = inlined_call_operand.vmem [shape: bf16[3,16,32], index: 2, kind: input, shape index: {}]
  %s3 = inlined_call_operand.vmem [shape: bf16[3,32,32], index: 3, kind: input, shape index: {}]
  %s4 = inlined_call_operand.vmem [shape: f32[3,1,32], index: 4, kind: input, shape index: {}]
  %s5 = inlined_call_operand.vmem [shape: f32[3,1,32], index: 5, kind: input, shape index: {}]
  %s6 = inlined_call_operand.vmem [shape: bf16[32,16], index: 6, kind: input, shape index: {}]
  %s7 = inlined_call_operand.vmem [shape: f32[1,16], index: 7, kind: input, shape index: {}]
  %s8 = inlined_call_operand.vmem [shape: f32[8,8,16], index: 8, kind: output, shape index: {0}]
  %s9 = inlined_call_operand.vmem [shape: f32[8,32], index: 9, kind: output, shape index: {1}]
  %10 = xla_tuple %s8, %s9
  %s11 = sld [smem:[#allocation0]]
  $region50: #{recurrent_forward.1} parent=0
    _
  %s13 = ssub.s32 1, %s11
  %s14 = scalar_select 0, %s13, %s11
  // Predicated region
  $region2: #{recurrent_forward.1} parent=0 // pred_check
    _
  $region3: #{recurrent_forward.1} parent=0 // pred_check_branch
    %16 = sbr.rel (0) target = $region5
  $region4: #{recurrent_forward.1} parent=0 // pred_region
    _
  $region5: #{recurrent_forward.1} parent=0 // pred_fallthru
    _
  // Predicated region
  $region6: #{recurrent_forward.1} parent=0 // pred_check
    _
  $region7: #{recurrent_forward.1} parent=0 // pred_check_branch
    %18 = sbr.rel (0) target = $region9
  $region8: #{recurrent_forward.1} parent=0 // pred_region
    _
  $region9: #{recurrent_forward.1} parent=0 // pred_fallthru
    _
  // Predicated region
  $region10: #{recurrent_forward.1} parent=0 // pred_check
    _
  $region11: #{recurrent_forward.1} parent=0 // pred_check_branch
    %20 = sbr.rel (0) target = $region13
  $region12: #{recurrent_forward.1} parent=0 // pred_region
    _
  $region13: #{recurrent_forward.1} parent=0 // pred_fallthru
    _
  // Predicated region
  $region14: #{recurrent_forward.1} parent=0 // pred_check
    _
  $region15: #{recurrent_forward.1} parent=0 // pred_check_branch
    %22 = sbr.rel (0) target = $region17
  $region16: #{recurrent_forward.1} parent=0 // pred_region
    _
  $region17: #{recurrent_forward.1} parent=0 // pred_fallthru
    _
  // Predicated region
  $region18: #{recurrent_forward.1} parent=0 // pred_check
    _
  $region19: #{recurrent_forward.1} parent=0 // pred_check_branch
    %24 = sbr.rel (0) target = $region21
  $region20: #{recurrent_forward.1} parent=0 // pred_region
    _
  $region21: #{recurrent_forward.1} parent=0 // pred_fallthru
    _
  // Predicated region
  $region22: #{recurrent_forward.1} parent=0 // pred_check
    _
  $region23: #{recurrent_forward.1} parent=0 // pred_check_branch
    %26 = sbr.rel (0) target = $region25
  $region24: #{recurrent_forward.1} parent=0 // pred_region
    _
  $region25: #{recurrent_forward.1} parent=0 // pred_fallthru
    _
  // Predicated region
  $region26: #{recurrent_forward.1} parent=0 // pred_check
    _
  $region27: #{recurrent_forward.1} parent=0 // pred_check_branch
    %28 = sbr.rel (0) target = $region29
  $region28: #{recurrent_forward.1} parent=0 // pred_region
    _
  $region29: #{recurrent_forward.1} parent=0 // pred_fallthru
    _
  // Predicated region
  $region30: #{recurrent_forward.1} parent=0 // pred_check
    _
  $region31: #{recurrent_forward.1} parent=0 // pred_check_branch
    %30 = sbr.rel (0) target = $region33
  $region32: #{recurrent_forward.1} parent=0 // pred_region
    _
  $region33: #{recurrent_forward.1} parent=0 // pred_fallthru
    _
  %v32 = vld [vmem:[%s0] sm:$0xff]
  %v33 = vld [vmem:[%s0 + $0x8] sm:$0xff]
  %v34 = vld [vmem:[%s0 + $0x10] sm:$0xff]
  %v35 = vld [vmem:[%s0 + $0x18] sm:$0xff]
  %v36 = vld [vmem:[%s0 + $0x20] sm:$0xff]
  %v37 = vld [vmem:[%s0 + $0x28] sm:$0xff]
  %v38 = vld [vmem:[%s0 + $0x30] sm:$0xff]
  %v39 = vld [vmem:[%s0 + $0x38] sm:$0xff]
  %v40 = vpack.c.bf16 %v33, %v32
  %v41 = vpack.c.bf16 %v35, %v34
  %v42 = vpack.c.bf16 %v37, %v36
  %v43 = vpack.c.bf16 %v39, %v38
  %v44 = vld [vmem:[%s2] sm:$0xf]
  %v45 = vld [vmem:[%s2 + $0x4] sm:$0xf]
  %v46 = vld [vmem:[%s4] sm:$0x1]
  %v48 = vlaneseq
  %v49 = vshrl.u32 %v48, 7
  %v50 = vsub.s32 0, %v49
  %v51 = vrot.slane %v46, %v50
  %v55 = vunpack.c.l.b16 %v44
  %v56 = vunpack.c.l.b16 %v45
  %v57 = vpack.c.b16 %v56, %v55
  %vm59 = vcmask 130048
  %v61 = vsel %vm59, %v40, 0
  %v64 = vsel %vm59, %v41, 0
  %v67 = vsel %vm59, %v42, 0
  %v70 = vsel %vm59, %v43, 0
  %72 = vmatprep.subr.bf16.mxu0 0
  %73 = vmatpush1.bf16.msra.mxu0 %v57
  %74 = vmatprep.subr.bf16.mxu0 0
  %75 = vmatpush1.bf16.msra.mxu0 0
  %76 = vmatprep.subr.bf16.mxu0 0
  %77 = vmatpush1.bf16.msra.mxu0 0
  %78 = vmatprep.subr.bf16.mxu0 0
  %79 = vmatpush1.bf16.msra.mxu0 0
  %80 = vmatprep.subr.bf16.mxu0 0
  %81 = vmatpush1.bf16.msra.mxu0 0
  %82 = vmatprep.subr.bf16.mxu0 0
  %83 = vmatpush1.bf16.msra.mxu0 0
  %84 = vmatprep.subr.bf16.mxu0 0
  %85 = vmatpush1.bf16.msra.mxu0 0
  %86 = vmatprep.subr.bf16.mxu0 0
  %87 = vmatpush1.bf16.msra.mxu0 0
  %88 = vmatprep.subr.bf16.mxu0 0
  %89 = vmatpush1.bf16.msra.mxu0 0
  %90 = vmatprep.subr.bf16.mxu0 0
  %91 = vmatpush1.bf16.msra.mxu0 0
  %92 = vmatprep.subr.bf16.mxu0 0
  %93 = vmatpush1.bf16.msra.mxu0 0
  %94 = vmatprep.subr.bf16.mxu0 0
  %95 = vmatpush1.bf16.msra.mxu0 0
  %96 = vmatprep.subr.bf16.mxu0 0
  %97 = vmatpush1.bf16.msra.mxu0 0
  %98 = vmatprep.subr.bf16.mxu0 0
  %99 = vmatpush1.bf16.msra.mxu0 0
  %100 = vmatprep.subr.bf16.mxu0 0
  %101 = vmatpush1.bf16.msra.mxu0 0
  %102 = vmatprep.subr.bf16.mxu0 0
  %103 = vmatpush1.bf16.msra.mxu0 0
  %104 = vmatprep.mubr.bf16.mxu0 0
  %105 = vmatmul.mubr.bf16.gmra.mrb[0].mxu0 %v61
  %v106 = vpop.f32.mrb[0].mxu0
  %v107 = vadd.f32 %v51, %v106
  %v108 = vpop.f32.mrb[0].mxu0
  %v109 = vpop.f32.mrb[0].mxu0
  %v110 = vadd.f32 %v51, %v109
  %v111 = vpop.f32.mrb[0].mxu0
  %112 = vmatprep.mubr.bf16.mxu0 0
  %113 = vmatmul.mubr.bf16.gmra.mrb[0].mxu0 %v64
  %v114 = vpop.f32.mrb[0].mxu0
  %v115 = vadd.f32 %v51, %v114
  %v116 = vpop.f32.mrb[0].mxu0
  %v117 = vpop.f32.mrb[0].mxu0
  %v118 = vadd.f32 %v51, %v117
  %v119 = vpop.f32.mrb[0].mxu0
  %120 = vmatprep.mubr.bf16.mxu0 0
  %121 = vmatmul.mubr.bf16.gmra.mrb[0].mxu0 %v67
  %v122 = vpop.f32.mrb[0].mxu0
  %v123 = vadd.f32 %v51, %v122
  %v124 = vpop.f32.mrb[0].mxu0
  %v125 = vpop.f32.mrb[0].mxu0
  %v126 = vadd.f32 %v51, %v125
  %v127 = vpop.f32.mrb[0].mxu0
  %128 = vmatprep.mubr.bf16.mxu0 0
  %129 = vmatmul.mubr.bf16.gmra.mrb[0].mxu0 %v70
  %v130 = vpop.f32.mrb[0].mxu0
  %v131 = vadd.f32 %v51, %v130
  %v132 = vpop.f32.mrb[0].mxu0
  %v133 = vpop.f32.mrb[0].mxu0
  %v134 = vadd.f32 %v51, %v133
  %v135 = vpop.f32.mrb[0].mxu0
  %136 = vdwg.mxu0
  %s137 = scalar_lea.vmem %s2, 8
  %v138 = vld [vmem:[%s137] sm:$0xf]
  %v139 = vld [vmem:[%s137 + $0x4] sm:$0xf]
  %s140 = scalar_lea.vmem %s4, 1
  %v141 = vld [vmem:[%s140] sm:$0x1]
  %v143 = vlaneseq
  %v144 = vshrl.u32 %v143, 7
  %v145 = vsub.s32 0, %v144
  %v146 = vrot.slane %v141, %v145
  %v150 = vunpack.c.l.b16 %v138
  %v151 = vunpack.c.l.b16 %v139
  %v152 = vpack.c.b16 %v151, %v150
  %154 = vmatprep.subr.bf16.mxu0 0
  %155 = vmatpush1.bf16.msra.mxu0 %v152
  %156 = vmatprep.subr.bf16.mxu0 0
  %157 = vmatpush1.bf16.msra.mxu0 0
  %158 = vmatprep.subr.bf16.mxu0 0
  %159 = vmatpush1.bf16.msra.mxu0 0
  %160 = vmatprep.subr.bf16.mxu0 0
  %161 = vmatpush1.bf16.msra.mxu0 0
  %162 = vmatprep.subr.bf16.mxu0 0
  %163 = vmatpush1.bf16.msra.mxu0 0
  %164 = vmatprep.subr.bf16.mxu0 0
  %165 = vmatpush1.bf16.msra.mxu0 0
  %166 = vmatprep.subr.bf16.mxu0 0
  %167 = vmatpush1.bf16.msra.mxu0 0
  %168 = vmatprep.subr.bf16.mxu0 0
  %169 = vmatpush1.bf16.msra.mxu0 0
  %170 = vmatprep.subr.bf16.mxu0 0
  %171 = vmatpush1.bf16.msra.mxu0 0
  %172 = vmatprep.subr.bf16.mxu0 0
  %173 = vmatpush1.bf16.msra.mxu0 0
  %174 = vmatprep.subr.bf16.mxu0 0
  %175 = vmatpush1.bf16.msra.mxu0 0
  %176 = vmatprep.subr.bf16.mxu0 0
  %177 = vmatpush1.bf16.msra.mxu0 0
  %178 = vmatprep.subr.bf16.mxu0 0
  %179 = vmatpush1.bf16.msra.mxu0 0
  %180 = vmatprep.subr.bf16.mxu0 0
  %181 = vmatpush1.bf16.msra.mxu0 0
  %182 = vmatprep.subr.bf16.mxu0 0
  %183 = vmatpush1.bf16.msra.mxu0 0
  %184 = vmatprep.subr.bf16.mxu0 0
  %185 = vmatpush1.bf16.msra.mxu0 0
  %186 = vmatprep.mubr.bf16.mxu0 0
  %187 = vmatmul.mubr.bf16.gmra.mrb[0].mxu0 %v61
  %v188 = vpop.f32.mrb[0].mxu0
  %v189 = vadd.f32 %v146, %v188
  %v190 = vpop.f32.mrb[0].mxu0
  %v191 = vpop.f32.mrb[0].mxu0
  %v192 = vadd.f32 %v146, %v191
  %v193 = vpop.f32.mrb[0].mxu0
  %194 = vmatprep.mubr.bf16.mxu0 0
  %195 = vmatmul.mubr.bf16.gmra.mrb[0].mxu0 %v64
  %v196 = vpop.f32.mrb[0].mxu0
  %v197 = vadd.f32 %v146, %v196
  %v198 = vpop.f32.mrb[0].mxu0
  %v199 = vpop.f32.mrb[0].mxu0
  %v200 = vadd.f32 %v146, %v199
  %v201 = vpop.f32.mrb[0].mxu0
  %202 = vmatprep.mubr.bf16.mxu0 0
  %203 = vmatmul.mubr.bf16.gmra.mrb[0].mxu0 %v67
  %v204 = vpop.f32.mrb[0].mxu0
  %v205 = vadd.f32 %v146, %v204
  %v206 = vpop.f32.mrb[0].mxu0
  %v207 = vpop.f32.mrb[0].mxu0
  %v208 = vadd.f32 %v146, %v207
  %v209 = vpop.f32.mrb[0].mxu0
  %210 = vmatprep.mubr.bf16.mxu0 0
  %211 = vmatmul.mubr.bf16.gmra.mrb[0].mxu0 %v70
  %v212 = vpop.f32.mrb[0].mxu0
  %v213 = vadd.f32 %v146, %v212
  %v214 = vpop.f32.mrb[0].mxu0
  %v215 = vpop.f32.mrb[0].mxu0
  %v216 = vadd.f32 %v146, %v215
  %v217 = vpop.f32.mrb[0].mxu0
  %218 = vdwg.mxu0
  %s219 = scalar_lea.vmem %s2, 16
  %v220 = vld [vmem:[%s219] sm:$0xf]
  %v221 = vld [vmem:[%s219 + $0x4] sm:$0xf]
  %s222 = scalar_lea.vmem %s4, 2
  %v223 = vld [vmem:[%s222] sm:$0x1]
  %v225 = vlaneseq
  %v226 = vshrl.u32 %v225, 7
  %v227 = vsub.s32 0, %v226
  %v228 = vrot.slane %v223, %v227
  %v232 = vunpack.c.l.b16 %v220
  %v233 = vunpack.c.l.b16 %v221
  %v234 = vpack.c.b16 %v233, %v232
  %236 = vmatprep.subr.bf16.mxu0 0
  %237 = vmatpush1.bf16.msra.mxu0 %v234
  %238 = vmatprep.subr.bf16.mxu0 0
  %239 = vmatpush1.bf16.msra.mxu0 0
  %240 = vmatprep.subr.bf16.mxu0 0
  %241 = vmatpush1.bf16.msra.mxu0 0
  %242 = vmatprep.subr.bf16.mxu0 0
  %243 = vmatpush1.bf16.msra.mxu0 0
  %244 = vmatprep.subr.bf16.mxu0 0
  %245 = vmatpush1.bf16.msra.mxu0 0
  %246 = vmatprep.subr.bf16.mxu0 0
  %247 = vmatpush1.bf16.msra.mxu0 0
  %248 = vmatprep.subr.bf16.mxu0 0
  %249 = vmatpush1.bf16.msra.mxu0 0
  %250 = vmatprep.subr.bf16.mxu0 0
  %251 = vmatpush1.bf16.msra.mxu0 0
  %252 = vmatprep.subr.bf16.mxu0 0
  %253 = vmatpush1.bf16.msra.mxu0 0
  %254 = vmatprep.subr.bf16.mxu0 0
  %255 = vmatpush1.bf16.msra.mxu0 0
  %256 = vmatprep.subr.bf16.mxu0 0
  %257 = vmatpush1.bf16.msra.mxu0 0
  %258 = vmatprep.subr.bf16.mxu0 0
  %259 = vmatpush1.bf16.msra.mxu0 0
  %260 = vmatprep.subr.bf16.mxu0 0
  %261 = vmatpush1.bf16.msra.mxu0 0
  %262 = vmatprep.subr.bf16.mxu0 0
  %263 = vmatpush1.bf16.msra.mxu0 0
  %264 = vmatprep.subr.bf16.mxu0 0
  %265 = vmatpush1.bf16.msra.mxu0 0
  %266 = vmatprep.subr.bf16.mxu0 0
  %267 = vmatpush1.bf16.msra.mxu0 0
  %268 = vmatprep.mubr.bf16.mxu0 0
  %269 = vmatmul.mubr.bf16.gmra.mrb[0].mxu0 %v61
  %v270 = vpop.f32.mrb[0].mxu0
  %v271 = vadd.f32 %v228, %v270
  %v272 = vpop.f32.mrb[0].mxu0
  %v273 = vpop.f32.mrb[0].mxu0
  %v274 = vadd.f32 %v228, %v273
  %v275 = vpop.f32.mrb[0].mxu0
  %276 = vmatprep.mubr.bf16.mxu0 0
  %277 = vmatmul.mubr.bf16.gmra.mrb[0].mxu0 %v64
  %v278 = vpop.f32.mrb[0].mxu0
  %v279 = vadd.f32 %v228, %v278
  %v280 = vpop.f32.mrb[0].mxu0
  %v281 = vpop.f32.mrb[0].mxu0
  %v282 = vadd.f32 %v228, %v281
  %v283 = vpop.f32.mrb[0].mxu0
  %284 = vmatprep.mubr.bf16.mxu0 0
  %285 = vmatmul.mubr.bf16.gmra.mrb[0].mxu0 %v67
  %v286 = vpop.f32.mrb[0].mxu0
  %v287 = vadd.f32 %v228, %v286
  %v288 = vpop.f32.mrb[0].mxu0
  %v289 = vpop.f32.mrb[0].mxu0
  %v290 = vadd.f32 %v228, %v289
  %v291 = vpop.f32.mrb[0].mxu0
  %292 = vmatprep.mubr.bf16.mxu0 0
  %293 = vmatmul.mubr.bf16.gmra.mrb[0].mxu0 %v70
  %v294 = vpop.f32.mrb[0].mxu0
  %v295 = vadd.f32 %v228, %v294
  %v296 = vpop.f32.mrb[0].mxu0
  %v297 = vpop.f32.mrb[0].mxu0
  %v298 = vadd.f32 %v228, %v297
  %v299 = vpop.f32.mrb[0].mxu0
  %300 = vdwg.mxu0
  %v301 = vld [vmem:[%s3] sm:$0xf]
  %v302 = vld [vmem:[%s3 + $0x4] sm:$0xf]
  %v303 = vld [vmem:[%s3 + $0x8] sm:$0xf]
  %v304 = vld [vmem:[%s3 + $0xc] sm:$0xf]
  %s305 = scalar_lea.vmem %s3, 16
  %v306 = vld [vmem:[%s305] sm:$0xf]
  %v307 = vld [vmem:[%s305 + $0x4] sm:$0xf]
  %v308 = vld [vmem:[%s305 + $0x8] sm:$0xf]
  %v309 = vld [vmem:[%s305 + $0xc] sm:$0xf]
  %s310 = scalar_lea.vmem %s3, 32
  %v311 = vld [vmem:[%s310] sm:$0xf]
  %v312 = vld [vmem:[%s310 + $0x4] sm:$0xf]
  %v313 = vld [vmem:[%s310 + $0x8] sm:$0xf]
  %v314 = vld [vmem:[%s310 + $0xc] sm:$0xf]
  %v315 = vld [vmem:[%s5] sm:$0x1]
  %s316 = scalar_lea.vmem %s5, 1
  %v317 = vld [vmem:[%s316] sm:$0x1]
  %s318 = scalar_lea.vmem %s5, 2
  %v319 = vld [vmem:[%s318] sm:$0x1]
  %v320 = vld [vmem:[%s1] sm:$0xff]
  %v321 = vpack.c.bf16 %v320, %v320
  %v323 = vlaneseq
  %v324 = vshrl.u32 %v323, 7
  %v325 = vsub.s32 0, %v324
  %v326 = vrot.slane %v315, %v325
  %v332 = vunpack.c.l.b16 %v301
  %v333 = vunpack.c.l.b16 %v302
  %v334 = vunpack.c.l.b16 %v303
  %v335 = vunpack.c.l.b16 %v304
  %v336 = vpack.c.b16 %v333, %v332
  %v337 = vpack.c.b16 %v335, %v334
  %vm340 = vcmask 261120
  %v342 = vsel %vm340, %v321, 0
  %344 = vmatprep.subr.bf16.mxu0 0
  %345 = vmatpush1.bf16.msra.mxu0 %v336
  %346 = vmatprep.subr.bf16.mxu0 0
  %347 = vmatpush1.bf16.msra.mxu0 %v337
  %348 = vmatprep.subr.bf16.mxu0 0
  %349 = vmatpush1.bf16.msra.mxu0 0
  %350 = vmatprep.subr.bf16.mxu0 0
  %351 = vmatpush1.bf16.msra.mxu0 0
  %352 = vmatprep.subr.bf16.mxu0 0
  %353 = vmatpush1.bf16.msra.mxu0 0
  %354 = vmatprep.subr.bf16.mxu0 0
  %355 = vmatpush1.bf16.msra.mxu0 0
  %356 = vmatprep.subr.bf16.mxu0 0
  %357 = vmatpush1.bf16.msra.mxu0 0
  %358 = vmatprep.subr.bf16.mxu0 0
  %359 = vmatpush1.bf16.msra.mxu0 0
  %360 = vmatprep.subr.bf16.mxu0 0
  %361 = vmatpush1.bf16.msra.mxu0 0
  %362 = vmatprep.subr.bf16.mxu0 0
  %363 = vmatpush1.bf16.msra.mxu0 0
  %364 = vmatprep.subr.bf16.mxu0 0
  %365 = vmatpush1.bf16.msra.mxu0 0
  %366 = vmatprep.subr.bf16.mxu0 0
  %367 = vmatpush1.bf16.msra.mxu0 0
  %368 = vmatprep.subr.bf16.mxu0 0
  %369 = vmatpush1.bf16.msra.mxu0 0
  %370 = vmatprep.subr.bf16.mxu0 0
  %371 = vmatpush1.bf16.msra.mxu0 0
  %372 = vmatprep.subr.bf16.mxu0 0
  %373 = vmatpush1.bf16.msra.mxu0 0
  %374 = vmatprep.subr.bf16.mxu0 0
  %375 = vmatpush1.bf16.msra.mxu0 0
  %376 = vmatprep.mubr.bf16.mxu0 0
  %377 = vmatmul.mubr.bf16.gmra.mrb[0].mxu0 %v342
  %v378 = vpop.f32.mrb[0].mxu0
  %v379 = vadd.f32 %v326, %v378
  %v380 = vpop.f32.mrb[0].mxu0
  %v381 = vpop.f32.mrb[0].mxu0
  %v382 = vpop.f32.mrb[0].mxu0
  %383 = vdwg.mxu0
  %v385 = vlaneseq
  %v386 = vshrl.u32 %v385, 7
  %v387 = vsub.s32 0, %v386
  %v388 = vrot.slane %v317, %v387
  %v394 = vunpack.c.l.b16 %v306
  %v395 = vunpack.c.l.b16 %v307
  %v396 = vunpack.c.l.b16 %v308
  %v397 = vunpack.c.l.b16 %v309
  %v398 = vpack.c.b16 %v395, %v394
  %v399 = vpack.c.b16 %v397, %v396
  %402 = vmatprep.subr.bf16.mxu0 0
  %403 = vmatpush1.bf16.msra.mxu0 %v398
  %404 = vmatprep.subr.bf16.mxu0 0
  %405 = vmatpush1.bf16.msra.mxu0 %v399
  %406 = vmatprep.subr.bf16.mxu0 0
  %407 = vmatpush1.bf16.msra.mxu0 0
  %408 = vmatprep.subr.bf16.mxu0 0
  %409 = vmatpush1.bf16.msra.mxu0 0
  %410 = vmatprep.subr.bf16.mxu0 0
  %411 = vmatpush1.bf16.msra.mxu0 0
  %412 = vmatprep.subr.bf16.mxu0 0
  %413 = vmatpush1.bf16.msra.mxu0 0
  %414 = vmatprep.subr.bf16.mxu0 0
  %415 = vmatpush1.bf16.msra.mxu0 0
  %416 = vmatprep.subr.bf16.mxu0 0
  %417 = vmatpush1.bf16.msra.mxu0 0
  %418 = vmatprep.subr.bf16.mxu0 0
  %419 = vmatpush1.bf16.msra.mxu0 0
  %420 = vmatprep.subr.bf16.mxu0 0
  %421 = vmatpush1.bf16.msra.mxu0 0
  %422 = vmatprep.subr.bf16.mxu0 0
  %423 = vmatpush1.bf16.msra.mxu0 0
  %424 = vmatprep.subr.bf16.mxu0 0
  %425 = vmatpush1.bf16.msra.mxu0 0
  %426 = vmatprep.subr.bf16.mxu0 0
  %427 = vmatpush1.bf16.msra.mxu0 0
  %428 = vmatprep.subr.bf16.mxu0 0
  %429 = vmatpush1.bf16.msra.mxu0 0
  %430 = vmatprep.subr.bf16.mxu0 0
  %431 = vmatpush1.bf16.msra.mxu0 0
  %432 = vmatprep.subr.bf16.mxu0 0
  %433 = vmatpush1.bf16.msra.mxu0 0
  %434 = vmatprep.mubr.bf16.mxu0 0
  %435 = vmatmul.mubr.bf16.gmra.mrb[0].mxu0 %v342
  %v436 = vpop.f32.mrb[0].mxu0
  %v437 = vadd.f32 %v388, %v436
  %v438 = vpop.f32.mrb[0].mxu0
  %v439 = vpop.f32.mrb[0].mxu0
  %v440 = vpop.f32.mrb[0].mxu0
  %441 = vdwg.mxu0
  %v443 = vlaneseq
  %v444 = vshrl.u32 %v443, 7
  %v445 = vsub.s32 0, %v444
  %v446 = vrot.slane %v319, %v445
  %v452 = vunpack.c.l.b16 %v311
  %v453 = vunpack.c.l.b16 %v312
  %v454 = vunpack.c.l.b16 %v313
  %v455 = vunpack.c.l.b16 %v314
  %v456 = vpack.c.b16 %v453, %v452
  %v457 = vpack.c.b16 %v455, %v454
  %460 = vmatprep.subr.bf16.mxu0 0
  %461 = vmatpush1.bf16.msra.mxu0 %v456
  %462 = vmatprep.subr.bf16.mxu0 0
  %463 = vmatpush1.bf16.msra.mxu0 %v457
  %464 = vmatprep.subr.bf16.mxu0 0
  %465 = vmatpush1.bf16.msra.mxu0 0
  %466 = vmatprep.subr.bf16.mxu0 0
  %467 = vmatpush1.bf16.msra.mxu0 0
  %468 = vmatprep.subr.bf16.mxu0 0
  %469 = vmatpush1.bf16.msra.mxu0 0
  %470 = vmatprep.subr.bf16.mxu0 0
  %471 = vmatpush1.bf16.msra.mxu0 0
  %472 = vmatprep.subr.bf16.mxu0 0
  %473 = vmatpush1.bf16.msra.mxu0 0
  %474 = vmatprep.subr.bf16.mxu0 0
  %475 = vmatpush1.bf16.msra.mxu0 0
  %476 = vmatprep.subr.bf16.mxu0 0
  %477 = vmatpush1.bf16.msra.mxu0 0
  %478 = vmatprep.subr.bf16.mxu0 0
  %479 = vmatpush1.bf16.msra.mxu0 0
  %480 = vmatprep.subr.bf16.mxu0 0
  %481 = vmatpush1.bf16.msra.mxu0 0
  %482 = vmatprep.subr.bf16.mxu0 0
  %483 = vmatpush1.bf16.msra.mxu0 0
  %484 = vmatprep.subr.bf16.mxu0 0
  %485 = vmatpush1.bf16.msra.mxu0 0
  %486 = vmatprep.subr.bf16.mxu0 0
  %487 = vmatpush1.bf16.msra.mxu0 0
  %488 = vmatprep.subr.bf16.mxu0 0
  %489 = vmatpush1.bf16.msra.mxu0 0
  %490 = vmatprep.subr.bf16.mxu0 0
  %491 = vmatpush1.bf16.msra.mxu0 0
  %492 = vmatprep.mubr.bf16.mxu0 0
  %493 = vmatmul.mubr.bf16.gmra.mrb[0].mxu0 %v342
  %v494 = vpop.f32.mrb[0].mxu0
  %v495 = vadd.f32 %v446, %v494
  %v496 = vpop.f32.mrb[0].mxu0
  %v497 = vpop.f32.mrb[0].mxu0
  %v498 = vpop.f32.mrb[0].mxu0
  %499 = vdwg.mxu0
  %v500 = vadd.f32 %v107, %v379
  %v501 = vxor.u32 %v500, 2147483648
  %v502 = vmul.f32 %v501, 1.442695
  %v503 = vpow.pop %v502
  %v504 = vadd.f32 %v503, 1.0
  %v505 = vrcp.pop %v504
  %v506 = vmul.f32 1.0, %v505
  %v507 = vadd.f32 %v189, %v437
  %v508 = vxor.u32 %v507, 2147483648
  %v509 = vmul.f32 %v508, 1.442695
  %v510 = vpow.pop %v509
  %v511 = vadd.f32 %v510, 1.0
  %v512 = vrcp.pop %v511
  %v513 = vmul.f32 1.0, %v512
  %v514 = vmul.f32 %v506, %v495
  %v515 = vadd.f32 %v271, %v514
  %v516 = vtanh.pop %v515
  %v517 = vsub.f32 1.0, %v513
  %v518 = vmul.f32 %v517, %v516
  %v519 = vmul.f32 %v513, %v320
  %v520 = vadd.f32 %v518, %v519
  %521 = vst.msk [vmem:[#allocation2] sm:$0xff] %vm340, %v520
  %v522 = vpack.c.bf16 %v520, %v520
  %v524 = vsel %vm340, %v522, 0
  %526 = vmatprep.subr.bf16.mxu0 0
  %527 = vmatpush1.bf16.msra.mxu0 %v336
  %528 = vmatprep.subr.bf16.mxu0 0
  %529 = vmatpush1.bf16.msra.mxu0 %v337
  %530 = vmatprep.subr.bf16.mxu0 0
  %531 = vmatpush1.bf16.msra.mxu0 0
  %532 = vmatprep.subr.bf16.mxu0 0
  %533 = vmatpush1.bf16.msra.mxu0 0
  %534 = vmatprep.subr.bf16.mxu0 0
  %535 = vmatpush1.bf16.msra.mxu0 0
  %536 = vmatprep.subr.bf16.mxu0 0
  %537 = vmatpush1.bf16.msra.mxu0 0
  %538 = vmatprep.subr.bf16.mxu0 0
  %539 = vmatpush1.bf16.msra.mxu0 0
  %540 = vmatprep.subr.bf16.mxu0 0
  %541 = vmatpush1.bf16.msra.mxu0 0
  %542 = vmatprep.subr.bf16.mxu0 0
  %543 = vmatpush1.bf16.msra.mxu0 0
  %544 = vmatprep.subr.bf16.mxu0 0
  %545 = vmatpush1.bf16.msra.mxu0 0
  %546 = vmatprep.subr.bf16.mxu0 0
  %547 = vmatpush1.bf16.msra.mxu0 0
  %548 = vmatprep.subr.bf16.mxu0 0
  %549 = vmatpush1.bf16.msra.mxu0 0
  %550 = vmatprep.subr.bf16.mxu0 0
  %551 = vmatpush1.bf16.msra.mxu0 0
  %552 = vmatprep.subr.bf16.mxu0 0
  %553 = vmatpush1.bf16.msra.mxu0 0
  %554 = vmatprep.subr.bf16.mxu0 0
  %555 = vmatpush1.bf16.msra.mxu0 0
  %556 = vmatprep.subr.bf16.mxu0 0
  %557 = vmatpush1.bf16.msra.mxu0 0
  %558 = vmatprep.mubr.bf16.mxu0 0
  %559 = vmatmul.mubr.bf16.gmra.mrb[0].mxu0 %v524
  %v560 = vpop.f32.mrb[0].mxu0
  %v561 = vadd.f32 %v326, %v560
  %v562 = vpop.f32.mrb[0].mxu0
  %v563 = vpop.f32.mrb[0].mxu0
  %v564 = vpop.f32.mrb[0].mxu0
  %565 = vdwg.mxu0
  %566 = vmatprep.subr.bf16.mxu0 0
  %567 = vmatpush1.bf16.msra.mxu0 %v398
  %568 = vmatprep.subr.bf16.mxu0 0
  %569 = vmatpush1.bf16.msra.mxu0 %v399
  %570 = vmatprep.subr.bf16.mxu0 0
  %571 = vmatpush1.bf16.msra.mxu0 0
  %572 = vmatprep.subr.bf16.mxu0 0
  %573 = vmatpush1.bf16.msra.mxu0 0
  %574 = vmatprep.subr.bf16.mxu0 0
  %575 = vmatpush1.bf16.msra.mxu0 0
  %576 = vmatprep.subr.bf16.mxu0 0
  %577 = vmatpush1.bf16.msra.mxu0 0
  %578 = vmatprep.subr.bf16.mxu0 0
  %579 = vmatpush1.bf16.msra.mxu0 0
  %580 = vmatprep.subr.bf16.mxu0 0
  %581 = vmatpush1.bf16.msra.mxu0 0
  %582 = vmatprep.subr.bf16.mxu0 0
  %583 = vmatpush1.bf16.msra.mxu0 0
  %584 = vmatprep.subr.bf16.mxu0 0
  %585 = vmatpush1.bf16.msra.mxu0 0
  %586 = vmatprep.subr.bf16.mxu0 0
  %587 = vmatpush1.bf16.msra.mxu0 0
  %588 = vmatprep.subr.bf16.mxu0 0
  %589 = vmatpush1.bf16.msra.mxu0 0
  %590 = vmatprep.subr.bf16.mxu0 0
  %591 = vmatpush1.bf16.msra.mxu0 0
  %592 = vmatprep.subr.bf16.mxu0 0
  %593 = vmatpush1.bf16.msra.mxu0 0
  %594 = vmatprep.subr.bf16.mxu0 0
  %595 = vmatpush1.bf16.msra.mxu0 0
  %596 = vmatprep.subr.bf16.mxu0 0
  %597 = vmatpush1.bf16.msra.mxu0 0
  %598 = vmatprep.mubr.bf16.mxu0 0
  %599 = vmatmul.mubr.bf16.gmra.mrb[0].mxu0 %v524
  %v600 = vpop.f32.mrb[0].mxu0
  %v601 = vadd.f32 %v388, %v600
  %v602 = vpop.f32.mrb[0].mxu0
  %v603 = vpop.f32.mrb[0].mxu0
  %v604 = vpop.f32.mrb[0].mxu0
  %605 = vdwg.mxu0
  %606 = vmatprep.subr.bf16.mxu0 0
  %607 = vmatpush1.bf16.msra.mxu0 %v456
  %608 = vmatprep.subr.bf16.mxu0 0
  %609 = vmatpush1.bf16.msra.mxu0 %v457
  %610 = vmatprep.subr.bf16.mxu0 0
  %611 = vmatpush1.bf16.msra.mxu0 0
  %612 = vmatprep.subr.bf16.mxu0 0
  %613 = vmatpush1.bf16.msra.mxu0 0
  %614 = vmatprep.subr.bf16.mxu0 0
  %615 = vmatpush1.bf16.msra.mxu0 0
  %616 = vmatprep.subr.bf16.mxu0 0
  %617 = vmatpush1.bf16.msra.mxu0 0
  %618 = vmatprep.subr.bf16.mxu0 0
  %619 = vmatpush1.bf16.msra.mxu0 0
  %620 = vmatprep.subr.bf16.mxu0 0
  %621 = vmatpush1.bf16.msra.mxu0 0
  %622 = vmatprep.subr.bf16.mxu0 0
  %623 = vmatpush1.bf16.msra.mxu0 0
  %624 = vmatprep.subr.bf16.mxu0 0
  %625 = vmatpush1.bf16.msra.mxu0 0
  %626 = vmatprep.subr.bf16.mxu0 0
  %627 = vmatpush1.bf16.msra.mxu0 0
  %628 = vmatprep.subr.bf16.mxu0 0
  %629 = vmatpush1.bf16.msra.mxu0 0
  %630 = vmatprep.subr.bf16.mxu0 0
  %631 = vmatpush1.bf16.msra.mxu0 0
  %632 = vmatprep.subr.bf16.mxu0 0
  %633 = vmatpush1.bf16.msra.mxu0 0
  %634 = vmatprep.subr.bf16.mxu0 0
  %635 = vmatpush1.bf16.msra.mxu0 0
  %636 = vmatprep.subr.bf16.mxu0 0
  %637 = vmatpush1.bf16.msra.mxu0 0
  %638 = vmatprep.mubr.bf16.mxu0 0
  %639 = vmatmul.mubr.bf16.gmra.mrb[0].mxu0 %v524
  %v640 = vpop.f32.mrb[0].mxu0
  %v641 = vadd.f32 %v446, %v640
  %v642 = vpop.f32.mrb[0].mxu0
  %v643 = vpop.f32.mrb[0].mxu0
  %v644 = vpop.f32.mrb[0].mxu0
  %645 = vdwg.mxu0
  %v646 = vadd.f32 %v110, %v561
  %v647 = vxor.u32 %v646, 2147483648
  %v648 = vmul.f32 %v647, 1.442695
  %v649 = vpow.pop %v648
  %v650 = vadd.f32 %v649, 1.0
  %v651 = vrcp.pop %v650
  %v652 = vmul.f32 1.0, %v651
  %v653 = vadd.f32 %v192, %v601
  %v654 = vxor.u32 %v653, 2147483648
  %v655 = vmul.f32 %v654, 1.442695
  %v656 = vpow.pop %v655
  %v657 = vadd.f32 %v656, 1.0
  %v658 = vrcp.pop %v657
  %v659 = vmul.f32 1.0, %v658
  %v660 = vmul.f32 %v652, %v641
  %v661 = vadd.f32 %v274, %v660
  %v662 = vtanh.pop %v661
  %v663 = vsub.f32 1.0, %v659
  %v664 = vmul.f32 %v663, %v662
  %v665 = vmul.f32 %v659, %v520
  %v666 = vadd.f32 %v664, %v665
  %667 = vst.msk [vmem:[#allocation2 + $0x8] sm:$0xff] %vm340, %v666
  %v668 = vpack.c.bf16 %v666, %v666
  %v670 = vsel %vm340, %v668, 0
  %672 = vmatprep.subr.bf16.mxu0 0
  %673 = vmatpush1.bf16.msra.mxu0 %v336
  %674 = vmatprep.subr.bf16.mxu0 0
  %675 = vmatpush1.bf16.msra.mxu0 %v337
  %676 = vmatprep.subr.bf16.mxu0 0
  %677 = vmatpush1.bf16.msra.mxu0 0
  %678 = vmatprep.subr.bf16.mxu0 0
  %679 = vmatpush1.bf16.msra.mxu0 0
  %680 = vmatprep.subr.bf16.mxu0 0
  %681 = vmatpush1.bf16.msra.mxu0 0
  %682 = vmatprep.subr.bf16.mxu0 0
  %683 = vmatpush1.bf16.msra.mxu0 0
  %684 = vmatprep.subr.bf16.mxu0 0
  %685 = vmatpush1.bf16.msra.mxu0 0
  %686 = vmatprep.subr.bf16.mxu0 0
  %687 = vmatpush1.bf16.msra.mxu0 0
  %688 = vmatprep.subr.bf16.mxu0 0
  %689 = vmatpush1.bf16.msra.mxu0 0
  %690 = vmatprep.subr.bf16.mxu0 0
  %691 = vmatpush1.bf16.msra.mxu0 0
  %692 = vmatprep.subr.bf16.mxu0 0
  %693 = vmatpush1.bf16.msra.mxu0 0
  %694 = vmatprep.subr.bf16.mxu0 0
  %695 = vmatpush1.bf16.msra.mxu0 0
  %696 = vmatprep.subr.bf16.mxu0 0
  %697 = vmatpush1.bf16.msra.mxu0 0
  %698 = vmatprep.subr.bf16.mxu0 0
  %699 = vmatpush1.bf16.msra.mxu0 0
  %700 = vmatprep.subr.bf16.mxu0 0
  %701 = vmatpush1.bf16.msra.mxu0 0
  %702 = vmatprep.subr.bf16.mxu0 0
  %703 = vmatpush1.bf16.msra.mxu0 0
  %704 = vmatprep.mubr.bf16.mxu0 0
  %705 = vmatmul.mubr.bf16.gmra.mrb[0].mxu0 %v670
  %v706 = vpop.f32.mrb[0].mxu0
  %v707 = vadd.f32 %v326, %v706
  %v708 = vpop.f32.mrb[0].mxu0
  %v709 = vpop.f32.mrb[0].mxu0
  %v710 = vpop.f32.mrb[0].mxu0
  %711 = vdwg.mxu0
  %712 = vmatprep.subr.bf16.mxu0 0
  %713 = vmatpush1.bf16.msra.mxu0 %v398
  %714 = vmatprep.subr.bf16.mxu0 0
  %715 = vmatpush1.bf16.msra.mxu0 %v399
  %716 = vmatprep.subr.bf16.mxu0 0
  %717 = vmatpush1.bf16.msra.mxu0 0
  %718 = vmatprep.subr.bf16.mxu0 0
  %719 = vmatpush1.bf16.msra.mxu0 0
  %720 = vmatprep.subr.bf16.mxu0 0
  %721 = vmatpush1.bf16.msra.mxu0 0
  %722 = vmatprep.subr.bf16.mxu0 0
  %723 = vmatpush1.bf16.msra.mxu0 0
  %724 = vmatprep.subr.bf16.mxu0 0
  %725 = vmatpush1.bf16.msra.mxu0 0
  %726 = vmatprep.subr.bf16.mxu0 0
  %727 = vmatpush1.bf16.msra.mxu0 0
  %728 = vmatprep.subr.bf16.mxu0 0
  %729 = vmatpush1.bf16.msra.mxu0 0
  %730 = vmatprep.subr.bf16.mxu0 0
  %731 = vmatpush1.bf16.msra.mxu0 0
  %732 = vmatprep.subr.bf16.mxu0 0
  %733 = vmatpush1.bf16.msra.mxu0 0
  %734 = vmatprep.subr.bf16.mxu0 0
  %735 = vmatpush1.bf16.msra.mxu0 0
  %736 = vmatprep.subr.bf16.mxu0 0
  %737 = vmatpush1.bf16.msra.mxu0 0
  %738 = vmatprep.subr.bf16.mxu0 0
  %739 = vmatpush1.bf16.msra.mxu0 0
  %740 = vmatprep.subr.bf16.mxu0 0
  %741 = vmatpush1.bf16.msra.mxu0 0
  %742 = vmatprep.subr.bf16.mxu0 0
  %743 = vmatpush1.bf16.msra.mxu0 0
  %744 = vmatprep.mubr.bf16.mxu0 0
  %745 = vmatmul.mubr.bf16.gmra.mrb[0].mxu0 %v670
  %v746 = vpop.f32.mrb[0].mxu0
  %v747 = vadd.f32 %v388, %v746
  %v748 = vpop.f32.mrb[0].mxu0
  %v749 = vpop.f32.mrb[0].mxu0
  %v750 = vpop.f32.mrb[0].mxu0
  %751 = vdwg.mxu0
  %752 = vmatprep.subr.bf16.mxu0 0
  %753 = vmatpush1.bf16.msra.mxu0 %v456
  %754 = vmatprep.subr.bf16.mxu0 0
  %755 = vmatpush1.bf16.msra.mxu0 %v457
  %756 = vmatprep.subr.bf16.mxu0 0
  %757 = vmatpush1.bf16.msra.mxu0 0
  %758 = vmatprep.subr.bf16.mxu0 0
  %759 = vmatpush1.bf16.msra.mxu0 0
  %760 = vmatprep.subr.bf16.mxu0 0
  %761 = vmatpush1.bf16.msra.mxu0 0
  %762 = vmatprep.subr.bf16.mxu0 0
  %763 = vmatpush1.bf16.msra.mxu0 0
  %764 = vmatprep.subr.bf16.mxu0 0
  %765 = vmatpush1.bf16.msra.mxu0 0
  %766 = vmatprep.subr.bf16.mxu0 0
  %767 = vmatpush1.bf16.msra.mxu0 0
  %768 = vmatprep.subr.bf16.mxu0 0
  %769 = vmatpush1.bf16.msra.mxu0 0
  %770 = vmatprep.subr.bf16.mxu0 0
  %771 = vmatpush1.bf16.msra.mxu0 0
  %772 = vmatprep.subr.bf16.mxu0 0
  %773 = vmatpush1.bf16.msra.mxu0 0
  %774 = vmatprep.subr.bf16.mxu0 0
  %775 = vmatpush1.bf16.msra.mxu0 0
  %776 = vmatprep.subr.bf16.mxu0 0
  %777 = vmatpush1.bf16.msra.mxu0 0
  %778 = vmatprep.subr.bf16.mxu0 0
  %779 = vmatpush1.bf16.msra.mxu0 0
  %780 = vmatprep.subr.bf16.mxu0 0
  %781 = vmatpush1.bf16.msra.mxu0 0
  %782 = vmatprep.subr.bf16.mxu0 0
  %783 = vmatpush1.bf16.msra.mxu0 0
  %784 = vmatprep.mubr.bf16.mxu0 0
  %785 = vmatmul.mubr.bf16.gmra.mrb[0].mxu0 %v670
  %v786 = vpop.f32.mrb[0].mxu0
  %v787 = vadd.f32 %v446, %v786
  %v788 = vpop.f32.mrb[0].mxu0
  %v789 = vpop.f32.mrb[0].mxu0
  %v790 = vpop.f32.mrb[0].mxu0
  %791 = vdwg.mxu0
  %v792 = vadd.f32 %v115, %v707
  %v793 = vxor.u32 %v792, 2147483648
  %v794 = vmul.f32 %v793, 1.442695
  %v795 = vpow.pop %v794
  %v796 = vadd.f32 %v795, 1.0
  %v797 = vrcp.pop %v796
  %v798 = vmul.f32 1.0, %v797
  %v799 = vadd.f32 %v197, %v747
  %v800 = vxor.u32 %v799, 2147483648
  %v801 = vmul.f32 %v800, 1.442695
  %v802 = vpow.pop %v801
  %v803 = vadd.f32 %v802, 1.0
  %v804 = vrcp.pop %v803
  %v805 = vmul.f32 1.0, %v804
  %v806 = vmul.f32 %v798, %v787
  %v807 = vadd.f32 %v279, %v806
  %v808 = vtanh.pop %v807
  %v809 = vsub.f32 1.0, %v805
  %v810 = vmul.f32 %v809, %v808
  %v811 = vmul.f32 %v805, %v666
  %v812 = vadd.f32 %v810, %v811
  %813 = vst.msk [vmem:[#allocation2 + $0x10] sm:$0xff] %vm340, %v812
  %v814 = vpack.c.bf16 %v812, %v812
  %v816 = vsel %vm340, %v814, 0
  %818 = vmatprep.subr.bf16.mxu0 0
  %819 = vmatpush1.bf16.msra.mxu0 %v336
  %820 = vmatprep.subr.bf16.mxu0 0
  %821 = vmatpush1.bf16.msra.mxu0 %v337
  %822 = vmatprep.subr.bf16.mxu0 0
  %823 = vmatpush1.bf16.msra.mxu0 0
  %824 = vmatprep.subr.bf16.mxu0 0
  %825 = vmatpush1.bf16.msra.mxu0 0
  %826 = vmatprep.subr.bf16.mxu0 0
  %827 = vmatpush1.bf16.msra.mxu0 0
  %828 = vmatprep.subr.bf16.mxu0 0
  %829 = vmatpush1.bf16.msra.mxu0 0
  %830 = vmatprep.subr.bf16.mxu0 0
  %831 = vmatpush1.bf16.msra.mxu0 0
  %832 = vmatprep.subr.bf16.mxu0 0
  %833 = vmatpush1.bf16.msra.mxu0 0
  %834 = vmatprep.subr.bf16.mxu0 0
  %835 = vmatpush1.bf16.msra.mxu0 0
  %836 = vmatprep.subr.bf16.mxu0 0
  %837 = vmatpush1.bf16.msra.mxu0 0
  %838 = vmatprep.subr.bf16.mxu0 0
  %839 = vmatpush1.bf16.msra.mxu0 0
  %840 = vmatprep.subr.bf16.mxu0 0
  %841 = vmatpush1.bf16.msra.mxu0 0
  %842 = vmatprep.subr.bf16.mxu0 0
  %843 = vmatpush1.bf16.msra.mxu0 0
  %844 = vmatprep.subr.bf16.mxu0 0
  %845 = vmatpush1.bf16.msra.mxu0 0
  %846 = vmatprep.subr.bf16.mxu0 0
  %847 = vmatpush1.bf16.msra.mxu0 0
  %848 = vmatprep.subr.bf16.mxu0 0
  %849 = vmatpush1.bf16.msra.mxu0 0
  %850 = vmatprep.mubr.bf16.mxu0 0
  %851 = vmatmul.mubr.bf16.gmra.mrb[0].mxu0 %v816
  %v852 = vpop.f32.mrb[0].mxu0
  %v853 = vadd.f32 %v326, %v852
  %v854 = vpop.f32.mrb[0].mxu0
  %v855 = vpop.f32.mrb[0].mxu0
  %v856 = vpop.f32.mrb[0].mxu0
  %857 = vdwg.mxu0
  %858 = vmatprep.subr.bf16.mxu0 0
  %859 = vmatpush1.bf16.msra.mxu0 %v398
  %860 = vmatprep.subr.bf16.mxu0 0
  %861 = vmatpush1.bf16.msra.mxu0 %v399
  %862 = vmatprep.subr.bf16.mxu0 0
  %863 = vmatpush1.bf16.msra.mxu0 0
  %864 = vmatprep.subr.bf16.mxu0 0
  %865 = vmatpush1.bf16.msra.mxu0 0
  %866 = vmatprep.subr.bf16.mxu0 0
  %867 = vmatpush1.bf16.msra.mxu0 0
  %868 = vmatprep.subr.bf16.mxu0 0
  %869 = vmatpush1.bf16.msra.mxu0 0
  %870 = vmatprep.subr.bf16.mxu0 0
  %871 = vmatpush1.bf16.msra.mxu0 0
  %872 = vmatprep.subr.bf16.mxu0 0
  %873 = vmatpush1.bf16.msra.mxu0 0
  %874 = vmatprep.subr.bf16.mxu0 0
  %875 = vmatpush1.bf16.msra.mxu0 0
  %876 = vmatprep.subr.bf16.mxu0 0
  %877 = vmatpush1.bf16.msra.mxu0 0
  %878 = vmatprep.subr.bf16.mxu0 0
  %879 = vmatpush1.bf16.msra.mxu0 0
  %880 = vmatprep.subr.bf16.mxu0 0
  %881 = vmatpush1.bf16.msra.mxu0 0
  %882 = vmatprep.subr.bf16.mxu0 0
  %883 = vmatpush1.bf16.msra.mxu0 0
  %884 = vmatprep.subr.bf16.mxu0 0
  %885 = vmatpush1.bf16.msra.mxu0 0
  %886 = vmatprep.subr.bf16.mxu0 0
  %887 = vmatpush1.bf16.msra.mxu0 0
  %888 = vmatprep.subr.bf16.mxu0 0
  %889 = vmatpush1.bf16.msra.mxu0 0
  %890 = vmatprep.mubr.bf16.mxu0 0
  %891 = vmatmul.mubr.bf16.gmra.mrb[0].mxu0 %v816
  %v892 = vpop.f32.mrb[0].mxu0
  %v893 = vadd.f32 %v388, %v892
  %v894 = vpop.f32.mrb[0].mxu0
  %v895 = vpop.f32.mrb[0].mxu0
  %v896 = vpop.f32.mrb[0].mxu0
  %897 = vdwg.mxu0
  %898 = vmatprep.subr.bf16.mxu0 0
  %899 = vmatpush1.bf16.msra.mxu0 %v456
  %900 = vmatprep.subr.bf16.mxu0 0
  %901 = vmatpush1.bf16.msra.mxu0 %v457
  %902 = vmatprep.subr.bf16.mxu0 0
  %903 = vmatpush1.bf16.msra.mxu0 0
  %904 = vmatprep.subr.bf16.mxu0 0
  %905 = vmatpush1.bf16.msra.mxu0 0
  %906 = vmatprep.subr.bf16.mxu0 0
  %907 = vmatpush1.bf16.msra.mxu0 0
  %908 = vmatprep.subr.bf16.mxu0 0
  %909 = vmatpush1.bf16.msra.mxu0 0
  %910 = vmatprep.subr.bf16.mxu0 0
  %911 = vmatpush1.bf16.msra.mxu0 0
  %912 = vmatprep.subr.bf16.mxu0 0
  %913 = vmatpush1.bf16.msra.mxu0 0
  %914 = vmatprep.subr.bf16.mxu0 0
  %915 = vmatpush1.bf16.msra.mxu0 0
  %916 = vmatprep.subr.bf16.mxu0 0
  %917 = vmatpush1.bf16.msra.mxu0 0
  %918 = vmatprep.subr.bf16.mxu0 0
  %919 = vmatpush1.bf16.msra.mxu0 0
  %920 = vmatprep.subr.bf16.mxu0 0
  %921 = vmatpush1.bf16.msra.mxu0 0
  %922 = vmatprep.subr.bf16.mxu0 0
  %923 = vmatpush1.bf16.msra.mxu0 0
  %924 = vmatprep.subr.bf16.mxu0 0
  %925 = vmatpush1.bf16.msra.mxu0 0
  %926 = vmatprep.subr.bf16.mxu0 0
  %927 = vmatpush1.bf16.msra.mxu0 0
  %928 = vmatprep.subr.bf16.mxu0 0
  %929 = vmatpush1.bf16.msra.mxu0 0
  %930 = vmatprep.mubr.bf16.mxu0 0
  %931 = vmatmul.mubr.bf16.gmra.mrb[0].mxu0 %v816
  %v932 = vpop.f32.mrb[0].mxu0
  %v933 = vadd.f32 %v446, %v932
  %v934 = vpop.f32.mrb[0].mxu0
  %v935 = vpop.f32.mrb[0].mxu0
  %v936 = vpop.f32.mrb[0].mxu0
  %937 = vdwg.mxu0
  %v938 = vadd.f32 %v118, %v853
  %v939 = vxor.u32 %v938, 2147483648
  %v940 = vmul.f32 %v939, 1.442695
  %v941 = vpow.pop %v940
  %v942 = vadd.f32 %v941, 1.0
  %v943 = vrcp.pop %v942
  %v944 = vmul.f32 1.0, %v943
  %v945 = vadd.f32 %v200, %v893
  %v946 = vxor.u32 %v945, 2147483648
  %v947 = vmul.f32 %v946, 1.442695
  %v948 = vpow.pop %v947
  %v949 = vadd.f32 %v948, 1.0
  %v950 = vrcp.pop %v949
  %v951 = vmul.f32 1.0, %v950
  %v952 = vmul.f32 %v944, %v933
  %v953 = vadd.f32 %v282, %v952
  %v954 = vtanh.pop %v953
  %v955 = vsub.f32 1.0, %v951
  %v956 = vmul.f32 %v955, %v954
  %v957 = vmul.f32 %v951, %v812
  %v958 = vadd.f32 %v956, %v957
  %959 = vst.msk [vmem:[#allocation2 + $0x18] sm:$0xff] %vm340, %v958
  %v960 = vpack.c.bf16 %v958, %v958
  %v962 = vsel %vm340, %v960, 0
  %964 = vmatprep.subr.bf16.mxu0 0
  %965 = vmatpush1.bf16.msra.mxu0 %v336
  %966 = vmatprep.subr.bf16.mxu0 0
  %967 = vmatpush1.bf16.msra.mxu0 %v337
  %968 = vmatprep.subr.bf16.mxu0 0
  %969 = vmatpush1.bf16.msra.mxu0 0
  %970 = vmatprep.subr.bf16.mxu0 0
  %971 = vmatpush1.bf16.msra.mxu0 0
  %972 = vmatprep.subr.bf16.mxu0 0
  %973 = vmatpush1.bf16.msra.mxu0 0
  %974 = vmatprep.subr.bf16.mxu0 0
  %975 = vmatpush1.bf16.msra.mxu0 0
  %976 = vmatprep.subr.bf16.mxu0 0
  %977 = vmatpush1.bf16.msra.mxu0 0
  %978 = vmatprep.subr.bf16.mxu0 0
  %979 = vmatpush1.bf16.msra.mxu0 0
  %980 = vmatprep.subr.bf16.mxu0 0
  %981 = vmatpush1.bf16.msra.mxu0 0
  %982 = vmatprep.subr.bf16.mxu0 0
  %983 = vmatpush1.bf16.msra.mxu0 0
  %984 = vmatprep.subr.bf16.mxu0 0
  %985 = vmatpush1.bf16.msra.mxu0 0
  %986 = vmatprep.subr.bf16.mxu0 0
  %987 = vmatpush1.bf16.msra.mxu0 0
  %988 = vmatprep.subr.bf16.mxu0 0
  %989 = vmatpush1.bf16.msra.mxu0 0
  %990 = vmatprep.subr.bf16.mxu0 0
  %991 = vmatpush1.bf16.msra.mxu0 0
  %992 = vmatprep.subr.bf16.mxu0 0
  %993 = vmatpush1.bf16.msra.mxu0 0
  %994 = vmatprep.subr.bf16.mxu0 0
  %995 = vmatpush1.bf16.msra.mxu0 0
  %996 = vmatprep.mubr.bf16.mxu0 0
  %997 = vmatmul.mubr.bf16.gmra.mrb[0].mxu0 %v962
  %v998 = vpop.f32.mrb[0].mxu0
  %v999 = vadd.f32 %v326, %v998
  %v1000 = vpop.f32.mrb[0].mxu0
  %v1001 = vpop.f32.mrb[0].mxu0
  %v1002 = vpop.f32.mrb[0].mxu0
  %1003 = vdwg.mxu0
  %1004 = vmatprep.subr.bf16.mxu0 0
  %1005 = vmatpush1.bf16.msra.mxu0 %v398
  %1006 = vmatprep.subr.bf16.mxu0 0
  %1007 = vmatpush1.bf16.msra.mxu0 %v399
  %1008 = vmatprep.subr.bf16.mxu0 0
  %1009 = vmatpush1.bf16.msra.mxu0 0
  %1010 = vmatprep.subr.bf16.mxu0 0
  %1011 = vmatpush1.bf16.msra.mxu0 0
  %1012 = vmatprep.subr.bf16.mxu0 0
  %1013 = vmatpush1.bf16.msra.mxu0 0
  %1014 = vmatprep.subr.bf16.mxu0 0
  %1015 = vmatpush1.bf16.msra.mxu0 0
  %1016 = vmatprep.subr.bf16.mxu0 0
  %1017 = vmatpush1.bf16.msra.mxu0 0
  %1018 = vmatprep.subr.bf16.mxu0 0
  %1019 = vmatpush1.bf16.msra.mxu0 0
  %1020 = vmatprep.subr.bf16.mxu0 0
  %1021 = vmatpush1.bf16.msra.mxu0 0
  %1022 = vmatprep.subr.bf16.mxu0 0
  %1023 = vmatpush1.bf16.msra.mxu0 0
  %1024 = vmatprep.subr.bf16.mxu0 0
  %1025 = vmatpush1.bf16.msra.mxu0 0
  %1026 = vmatprep.subr.bf16.mxu0 0
  %1027 = vmatpush1.bf16.msra.mxu0 0
  %1028 = vmatprep.subr.bf16.mxu0 0
  %1029 = vmatpush1.bf16.msra.mxu0 0
  %1030 = vmatprep.subr.bf16.mxu0 0
  %1031 = vmatpush1.bf16.msra.mxu0 0
  %1032 = vmatprep.subr.bf16.mxu0 0
  %1033 = vmatpush1.bf16.msra.mxu0 0
  %1034 = vmatprep.subr.bf16.mxu0 0
  %1035 = vmatpush1.bf16.msra.mxu0 0
  %1036 = vmatprep.mubr.bf16.mxu0 0
  %1037 = vmatmul.mubr.bf16.gmra.mrb[0].mxu0 %v962
  %v1038 = vpop.f32.mrb[0].mxu0
  %v1039 = vadd.f32 %v388, %v1038
  %v1040 = vpop.f32.mrb[0].mxu0
  %v1041 = vpop.f32.mrb[0].mxu0
  %v1042 = vpop.f32.mrb[0].mxu0
  %1043 = vdwg.mxu0
  %1044 = vmatprep.subr.bf16.mxu0 0
  %1045 = vmatpush1.bf16.msra.mxu0 %v456
  %1046 = vmatprep.subr.bf16.mxu0 0
  %1047 = vmatpush1.bf16.msra.mxu0 %v457
  %1048 = vmatprep.subr.bf16.mxu0 0
  %1049 = vmatpush1.bf16.msra.mxu0 0
  %1050 = vmatprep.subr.bf16.mxu0 0
  %1051 = vmatpush1.bf16.msra.mxu0 0
  %1052 = vmatprep.subr.bf16.mxu0 0
  %1053 = vmatpush1.bf16.msra.mxu0 0
  %1054 = vmatprep.subr.bf16.mxu0 0
  %1055 = vmatpush1.bf16.msra.mxu0 0
  %1056 = vmatprep.subr.bf16.mxu0 0
  %1057 = vmatpush1.bf16.msra.mxu0 0
  %1058 = vmatprep.subr.bf16.mxu0 0
  %1059 = vmatpush1.bf16.msra.mxu0 0
  %1060 = vmatprep.subr.bf16.mxu0 0
  %1061 = vmatpush1.bf16.msra.mxu0 0
  %1062 = vmatprep.subr.bf16.mxu0 0
  %1063 = vmatpush1.bf16.msra.mxu0 0
  %1064 = vmatprep.subr.bf16.mxu0 0
  %1065 = vmatpush1.bf16.msra.mxu0 0
  %1066 = vmatprep.subr.bf16.mxu0 0
  %1067 = vmatpush1.bf16.msra.mxu0 0
  %1068 = vmatprep.subr.bf16.mxu0 0
  %1069 = vmatpush1.bf16.msra.mxu0 0
  %1070 = vmatprep.subr.bf16.mxu0 0
  %1071 = vmatpush1.bf16.msra.mxu0 0
  %1072 = vmatprep.subr.bf16.mxu0 0
  %1073 = vmatpush1.bf16.msra.mxu0 0
  %1074 = vmatprep.subr.bf16.mxu0 0
  %1075 = vmatpush1.bf16.msra.mxu0 0
  %1076 = vmatprep.mubr.bf16.mxu0 0
  %1077 = vmatmul.mubr.bf16.gmra.mrb[0].mxu0 %v962
  %v1078 = vpop.f32.mrb[0].mxu0
  %v1079 = vadd.f32 %v446, %v1078
  %v1080 = vpop.f32.mrb[0].mxu0
  %v1081 = vpop.f32.mrb[0].mxu0
  %v1082 = vpop.f32.mrb[0].mxu0
  %1083 = vdwg.mxu0
  %v1084 = vadd.f32 %v123, %v999
  %v1085 = vxor.u32 %v1084, 2147483648
  %v1086 = vmul.f32 %v1085, 1.442695
  %v1087 = vpow.pop %v1086
  %v1088 = vadd.f32 %v1087, 1.0
  %v1089 = vrcp.pop %v1088
  %v1090 = vmul.f32 1.0, %v1089
  %v1091 = vadd.f32 %v205, %v1039
  %v1092 = vxor.u32 %v1091, 2147483648
  %v1093 = vmul.f32 %v1092, 1.442695
  %v1094 = vpow.pop %v1093
  %v1095 = vadd.f32 %v1094, 1.0
  %v1096 = vrcp.pop %v1095
  %v1097 = vmul.f32 1.0, %v1096
  %v1098 = vmul.f32 %v1090, %v1079
  %v1099 = vadd.f32 %v287, %v1098
  %v1100 = vtanh.pop %v1099
  %v1101 = vsub.f32 1.0, %v1097
  %v1102 = vmul.f32 %v1101, %v1100
  %v1103 = vmul.f32 %v1097, %v958
  %v1104 = vadd.f32 %v1102, %v1103
  %1105 = vst.msk [vmem:[#allocation2 + $0x20] sm:$0xff] %vm340, %v1104
  %v1106 = vpack.c.bf16 %v1104, %v1104
  %v1108 = vsel %vm340, %v1106, 0
  %1110 = vmatprep.subr.bf16.mxu0 0
  %1111 = vmatpush1.bf16.msra.mxu0 %v336
  %1112 = vmatprep.subr.bf16.mxu0 0
  %1113 = vmatpush1.bf16.msra.mxu0 %v337
  %1114 = vmatprep.subr.bf16.mxu0 0
  %1115 = vmatpush1.bf16.msra.mxu0 0
  %1116 = vmatprep.subr.bf16.mxu0 0
  %1117 = vmatpush1.bf16.msra.mxu0 0
  %1118 = vmatprep.subr.bf16.mxu0 0
  %1119 = vmatpush1.bf16.msra.mxu0 0
  %1120 = vmatprep.subr.bf16.mxu0 0
  %1121 = vmatpush1.bf16.msra.mxu0 0
  %1122 = vmatprep.subr.bf16.mxu0 0
  %1123 = vmatpush1.bf16.msra.mxu0 0
  %1124 = vmatprep.subr.bf16.mxu0 0
  %1125 = vmatpush1.bf16.msra.mxu0 0
  %1126 = vmatprep.subr.bf16.mxu0 0
  %1127 = vmatpush1.bf16.msra.mxu0 0
  %1128 = vmatprep.subr.bf16.mxu0 0
  %1129 = vmatpush1.bf16.msra.mxu0 0
  %1130 = vmatprep.subr.bf16.mxu0 0
  %1131 = vmatpush1.bf16.msra.mxu0 0
  %1132 = vmatprep.subr.bf16.mxu0 0
  %1133 = vmatpush1.bf16.msra.mxu0 0
  %1134 = vmatprep.subr.bf16.mxu0 0
  %1135 = vmatpush1.bf16.msra.mxu0 0
  %1136 = vmatprep.subr.bf16.mxu0 0
  %1137 = vmatpush1.bf16.msra.mxu0 0
  %1138 = vmatprep.subr.bf16.mxu0 0
  %1139 = vmatpush1.bf16.msra.mxu0 0
  %1140 = vmatprep.subr.bf16.mxu0 0
  %1141 = vmatpush1.bf16.msra.mxu0 0
  %1142 = vmatprep.mubr.bf16.mxu0 0
  %1143 = vmatmul.mubr.bf16.gmra.mrb[0].mxu0 %v1108
  %v1144 = vpop.f32.mrb[0].mxu0
  %v1145 = vadd.f32 %v326, %v1144
  %v1146 = vpop.f32.mrb[0].mxu0
  %v1147 = vpop.f32.mrb[0].mxu0
  %v1148 = vpop.f32.mrb[0].mxu0
  %1149 = vdwg.mxu0
  %1150 = vmatprep.subr.bf16.mxu0 0
  %1151 = vmatpush1.bf16.msra.mxu0 %v398
  %1152 = vmatprep.subr.bf16.mxu0 0
  %1153 = vmatpush1.bf16.msra.mxu0 %v399
  %1154 = vmatprep.subr.bf16.mxu0 0
  %1155 = vmatpush1.bf16.msra.mxu0 0
  %1156 = vmatprep.subr.bf16.mxu0 0
  %1157 = vmatpush1.bf16.msra.mxu0 0
  %1158 = vmatprep.subr.bf16.mxu0 0
  %1159 = vmatpush1.bf16.msra.mxu0 0
  %1160 = vmatprep.subr.bf16.mxu0 0
  %1161 = vmatpush1.bf16.msra.mxu0 0
  %1162 = vmatprep.subr.bf16.mxu0 0
  %1163 = vmatpush1.bf16.msra.mxu0 0
  %1164 = vmatprep.subr.bf16.mxu0 0
  %1165 = vmatpush1.bf16.msra.mxu0 0
  %1166 = vmatprep.subr.bf16.mxu0 0
  %1167 = vmatpush1.bf16.msra.mxu0 0
  %1168 = vmatprep.subr.bf16.mxu0 0
  %1169 = vmatpush1.bf16.msra.mxu0 0
  %1170 = vmatprep.subr.bf16.mxu0 0
  %1171 = vmatpush1.bf16.msra.mxu0 0
  %1172 = vmatprep.subr.bf16.mxu0 0
  %1173 = vmatpush1.bf16.msra.mxu0 0
  %1174 = vmatprep.subr.bf16.mxu0 0
  %1175 = vmatpush1.bf16.msra.mxu0 0
  %1176 = vmatprep.subr.bf16.mxu0 0
  %1177 = vmatpush1.bf16.msra.mxu0 0
  %1178 = vmatprep.subr.bf16.mxu0 0
  %1179 = vmatpush1.bf16.msra.mxu0 0
  %1180 = vmatprep.subr.bf16.mxu0 0
  %1181 = vmatpush1.bf16.msra.mxu0 0
  %1182 = vmatprep.mubr.bf16.mxu0 0
  %1183 = vmatmul.mubr.bf16.gmra.mrb[0].mxu0 %v1108
  %v1184 = vpop.f32.mrb[0].mxu0
  %v1185 = vadd.f32 %v388, %v1184
  %v1186 = vpop.f32.mrb[0].mxu0
  %v1187 = vpop.f32.mrb[0].mxu0
  %v1188 = vpop.f32.mrb[0].mxu0
  %1189 = vdwg.mxu0
  %1190 = vmatprep.subr.bf16.mxu0 0
  %1191 = vmatpush1.bf16.msra.mxu0 %v456
  %1192 = vmatprep.subr.bf16.mxu0 0
  %1193 = vmatpush1.bf16.msra.mxu0 %v457
  %1194 = vmatprep.subr.bf16.mxu0 0
  %1195 = vmatpush1.bf16.msra.mxu0 0
  %1196 = vmatprep.subr.bf16.mxu0 0
  %1197 = vmatpush1.bf16.msra.mxu0 0
  %1198 = vmatprep.subr.bf16.mxu0 0
  %1199 = vmatpush1.bf16.msra.mxu0 0
  %1200 = vmatprep.subr.bf16.mxu0 0
  %1201 = vmatpush1.bf16.msra.mxu0 0
  %1202 = vmatprep.subr.bf16.mxu0 0
  %1203 = vmatpush1.bf16.msra.mxu0 0
  %1204 = vmatprep.subr.bf16.mxu0 0
  %1205 = vmatpush1.bf16.msra.mxu0 0
  %1206 = vmatprep.subr.bf16.mxu0 0
  %1207 = vmatpush1.bf16.msra.mxu0 0
  %1208 = vmatprep.subr.bf16.mxu0 0
  %1209 = vmatpush1.bf16.msra.mxu0 0
  %1210 = vmatprep.subr.bf16.mxu0 0
  %1211 = vmatpush1.bf16.msra.mxu0 0
  %1212 = vmatprep.subr.bf16.mxu0 0
  %1213 = vmatpush1.bf16.msra.mxu0 0
  %1214 = vmatprep.subr.bf16.mxu0 0
  %1215 = vmatpush1.bf16.msra.mxu0 0
  %1216 = vmatprep.subr.bf16.mxu0 0
  %1217 = vmatpush1.bf16.msra.mxu0 0
  %1218 = vmatprep.subr.bf16.mxu0 0
  %1219 = vmatpush1.bf16.msra.mxu0 0
  %1220 = vmatprep.subr.bf16.mxu0 0
  %1221 = vmatpush1.bf16.msra.mxu0 0
  %1222 = vmatprep.mubr.bf16.mxu0 0
  %1223 = vmatmul.mubr.bf16.gmra.mrb[0].mxu0 %v1108
  %v1224 = vpop.f32.mrb[0].mxu0
  %v1225 = vadd.f32 %v446, %v1224
  %v1226 = vpop.f32.mrb[0].mxu0
  %v1227 = vpop.f32.mrb[0].mxu0
  %v1228 = vpop.f32.mrb[0].mxu0
  %1229 = vdwg.mxu0
  %v1230 = vadd.f32 %v126, %v1145
  %v1231 = vxor.u32 %v1230, 2147483648
  %v1232 = vmul.f32 %v1231, 1.442695
  %v1233 = vpow.pop %v1232
  %v1234 = vadd.f32 %v1233, 1.0
  %v1235 = vrcp.pop %v1234
  %v1236 = vmul.f32 1.0, %v1235
  %v1237 = vadd.f32 %v208, %v1185
  %v1238 = vxor.u32 %v1237, 2147483648
  %v1239 = vmul.f32 %v1238, 1.442695
  %v1240 = vpow.pop %v1239
  %v1241 = vadd.f32 %v1240, 1.0
  %v1242 = vrcp.pop %v1241
  %v1243 = vmul.f32 1.0, %v1242
  %v1244 = vmul.f32 %v1236, %v1225
  %v1245 = vadd.f32 %v290, %v1244
  %v1246 = vtanh.pop %v1245
  %v1247 = vsub.f32 1.0, %v1243
  %v1248 = vmul.f32 %v1247, %v1246
  %v1249 = vmul.f32 %v1243, %v1104
  %v1250 = vadd.f32 %v1248, %v1249
  %1251 = vst.msk [vmem:[#allocation2 + $0x28] sm:$0xff] %vm340, %v1250
  %v1252 = vpack.c.bf16 %v1250, %v1250
  %v1254 = vsel %vm340, %v1252, 0
  %1256 = vmatprep.subr.bf16.mxu0 0
  %1257 = vmatpush1.bf16.msra.mxu0 %v336
  %1258 = vmatprep.subr.bf16.mxu0 0
  %1259 = vmatpush1.bf16.msra.mxu0 %v337
  %1260 = vmatprep.subr.bf16.mxu0 0
  %1261 = vmatpush1.bf16.msra.mxu0 0
  %1262 = vmatprep.subr.bf16.mxu0 0
  %1263 = vmatpush1.bf16.msra.mxu0 0
  %1264 = vmatprep.subr.bf16.mxu0 0
  %1265 = vmatpush1.bf16.msra.mxu0 0
  %1266 = vmatprep.subr.bf16.mxu0 0
  %1267 = vmatpush1.bf16.msra.mxu0 0
  %1268 = vmatprep.subr.bf16.mxu0 0
  %1269 = vmatpush1.bf16.msra.mxu0 0
  %1270 = vmatprep.subr.bf16.mxu0 0
  %1271 = vmatpush1.bf16.msra.mxu0 0
  %1272 = vmatprep.subr.bf16.mxu0 0
  %1273 = vmatpush1.bf16.msra.mxu0 0
  %1274 = vmatprep.subr.bf16.mxu0 0
  %1275 = vmatpush1.bf16.msra.mxu0 0
  %1276 = vmatprep.subr.bf16.mxu0 0
  %1277 = vmatpush1.bf16.msra.mxu0 0
  %1278 = vmatprep.subr.bf16.mxu0 0
  %1279 = vmatpush1.bf16.msra.mxu0 0
  %1280 = vmatprep.subr.bf16.mxu0 0
  %1281 = vmatpush1.bf16.msra.mxu0 0
  %1282 = vmatprep.subr.bf16.mxu0 0
  %1283 = vmatpush1.bf16.msra.mxu0 0
  %1284 = vmatprep.subr.bf16.mxu0 0
  %1285 = vmatpush1.bf16.msra.mxu0 0
  %1286 = vmatprep.subr.bf16.mxu0 0
  %1287 = vmatpush1.bf16.msra.mxu0 0
  %1288 = vmatprep.mubr.bf16.mxu0 0
  %1289 = vmatmul.mubr.bf16.gmra.mrb[0].mxu0 %v1254
  %v1290 = vpop.f32.mrb[0].mxu0
  %v1291 = vadd.f32 %v326, %v1290
  %v1292 = vpop.f32.mrb[0].mxu0
  %v1293 = vpop.f32.mrb[0].mxu0
  %v1294 = vpop.f32.mrb[0].mxu0
  %1295 = vdwg.mxu0
  %1296 = vmatprep.subr.bf16.mxu0 0
  %1297 = vmatpush1.bf16.msra.mxu0 %v398
  %1298 = vmatprep.subr.bf16.mxu0 0
  %1299 = vmatpush1.bf16.msra.mxu0 %v399
  %1300 = vmatprep.subr.bf16.mxu0 0
  %1301 = vmatpush1.bf16.msra.mxu0 0
  %1302 = vmatprep.subr.bf16.mxu0 0
  %1303 = vmatpush1.bf16.msra.mxu0 0
  %1304 = vmatprep.subr.bf16.mxu0 0
  %1305 = vmatpush1.bf16.msra.mxu0 0
  %1306 = vmatprep.subr.bf16.mxu0 0
  %1307 = vmatpush1.bf16.msra.mxu0 0
  %1308 = vmatprep.subr.bf16.mxu0 0
  %1309 = vmatpush1.bf16.msra.mxu0 0
  %1310 = vmatprep.subr.bf16.mxu0 0
  %1311 = vmatpush1.bf16.msra.mxu0 0
  %1312 = vmatprep.subr.bf16.mxu0 0
  %1313 = vmatpush1.bf16.msra.mxu0 0
  %1314 = vmatprep.subr.bf16.mxu0 0
  %1315 = vmatpush1.bf16.msra.mxu0 0
  %1316 = vmatprep.subr.bf16.mxu0 0
  %1317 = vmatpush1.bf16.msra.mxu0 0
  %1318 = vmatprep.subr.bf16.mxu0 0
  %1319 = vmatpush1.bf16.msra.mxu0 0
  %1320 = vmatprep.subr.bf16.mxu0 0
  %1321 = vmatpush1.bf16.msra.mxu0 0
  %1322 = vmatprep.subr.bf16.mxu0 0
  %1323 = vmatpush1.bf16.msra.mxu0 0
  %1324 = vmatprep.subr.bf16.mxu0 0
  %1325 = vmatpush1.bf16.msra.mxu0 0
  %1326 = vmatprep.subr.bf16.mxu0 0
  %1327 = vmatpush1.bf16.msra.mxu0 0
  %1328 = vmatprep.mubr.bf16.mxu0 0
  %1329 = vmatmul.mubr.bf16.gmra.mrb[0].mxu0 %v1254
  %v1330 = vpop.f32.mrb[0].mxu0
  %v1331 = vadd.f32 %v388, %v1330
  %v1332 = vpop.f32.mrb[0].mxu0
  %v1333 = vpop.f32.mrb[0].mxu0
  %v1334 = vpop.f32.mrb[0].mxu0
  %1335 = vdwg.mxu0
  %1336 = vmatprep.subr.bf16.mxu0 0
  %1337 = vmatpush1.bf16.msra.mxu0 %v456
  %1338 = vmatprep.subr.bf16.mxu0 0
  %1339 = vmatpush1.bf16.msra.mxu0 %v457
  %1340 = vmatprep.subr.bf16.mxu0 0
  %1341 = vmatpush1.bf16.msra.mxu0 0
  %1342 = vmatprep.subr.bf16.mxu0 0
  %1343 = vmatpush1.bf16.msra.mxu0 0
  %1344 = vmatprep.subr.bf16.mxu0 0
  %1345 = vmatpush1.bf16.msra.mxu0 0
  %1346 = vmatprep.subr.bf16.mxu0 0
  %1347 = vmatpush1.bf16.msra.mxu0 0
  %1348 = vmatprep.subr.bf16.mxu0 0
  %1349 = vmatpush1.bf16.msra.mxu0 0
  %1350 = vmatprep.subr.bf16.mxu0 0
  %1351 = vmatpush1.bf16.msra.mxu0 0
  %1352 = vmatprep.subr.bf16.mxu0 0
  %1353 = vmatpush1.bf16.msra.mxu0 0
  %1354 = vmatprep.subr.bf16.mxu0 0
  %1355 = vmatpush1.bf16.msra.mxu0 0
  %1356 = vmatprep.subr.bf16.mxu0 0
  %1357 = vmatpush1.bf16.msra.mxu0 0
  %1358 = vmatprep.subr.bf16.mxu0 0
  %1359 = vmatpush1.bf16.msra.mxu0 0
  %1360 = vmatprep.subr.bf16.mxu0 0
  %1361 = vmatpush1.bf16.msra.mxu0 0
  %1362 = vmatprep.subr.bf16.mxu0 0
  %1363 = vmatpush1.bf16.msra.mxu0 0
  %1364 = vmatprep.subr.bf16.mxu0 0
  %1365 = vmatpush1.bf16.msra.mxu0 0
  %1366 = vmatprep.subr.bf16.mxu0 0
  %1367 = vmatpush1.bf16.msra.mxu0 0
  %1368 = vmatprep.mubr.bf16.mxu0 0
  %1369 = vmatmul.mubr.bf16.gmra.mrb[0].mxu0 %v1254
  %v1370 = vpop.f32.mrb[0].mxu0
  %v1371 = vadd.f32 %v446, %v1370
  %v1372 = vpop.f32.mrb[0].mxu0
  %v1373 = vpop.f32.mrb[0].mxu0
  %v1374 = vpop.f32.mrb[0].mxu0
  %1375 = vdwg.mxu0
  %v1376 = vadd.f32 %v131, %v1291
  %v1377 = vxor.u32 %v1376, 2147483648
  %v1378 = vmul.f32 %v1377, 1.442695
  %v1379 = vpow.pop %v1378
  %v1380 = vadd.f32 %v1379, 1.0
  %v1381 = vrcp.pop %v1380
  %v1382 = vmul.f32 1.0, %v1381
  %v1383 = vadd.f32 %v213, %v1331
  %v1384 = vxor.u32 %v1383, 2147483648
  %v1385 = vmul.f32 %v1384, 1.442695
  %v1386 = vpow.pop %v1385
  %v1387 = vadd.f32 %v1386, 1.0
  %v1388 = vrcp.pop %v1387
  %v1389 = vmul.f32 1.0, %v1388
  %v1390 = vmul.f32 %v1382, %v1371
  %v1391 = vadd.f32 %v295, %v1390
  %v1392 = vtanh.pop %v1391
  %v1393 = vsub.f32 1.0, %v1389
  %v1394 = vmul.f32 %v1393, %v1392
  %v1395 = vmul.f32 %v1389, %v1250
  %v1396 = vadd.f32 %v1394, %v1395
  %1397 = vst.msk [vmem:[#allocation2 + $0x30] sm:$0xff] %vm340, %v1396
  %v1398 = vpack.c.bf16 %v1396, %v1396
  %v1400 = vsel %vm340, %v1398, 0
  %1402 = vmatprep.subr.bf16.mxu0 0
  %1403 = vmatpush1.bf16.msra.mxu0 %v336
  %1404 = vmatprep.subr.bf16.mxu0 0
  %1405 = vmatpush1.bf16.msra.mxu0 %v337
  %1406 = vmatprep.subr.bf16.mxu0 0
  %1407 = vmatpush1.bf16.msra.mxu0 0
  %1408 = vmatprep.subr.bf16.mxu0 0
  %1409 = vmatpush1.bf16.msra.mxu0 0
  %1410 = vmatprep.subr.bf16.mxu0 0
  %1411 = vmatpush1.bf16.msra.mxu0 0
  %1412 = vmatprep.subr.bf16.mxu0 0
  %1413 = vmatpush1.bf16.msra.mxu0 0
  %1414 = vmatprep.subr.bf16.mxu0 0
  %1415 = vmatpush1.bf16.msra.mxu0 0
  %1416 = vmatprep.subr.bf16.mxu0 0
  %1417 = vmatpush1.bf16.msra.mxu0 0
  %1418 = vmatprep.subr.bf16.mxu0 0
  %1419 = vmatpush1.bf16.msra.mxu0 0
  %1420 = vmatprep.subr.bf16.mxu0 0
  %1421 = vmatpush1.bf16.msra.mxu0 0
  %1422 = vmatprep.subr.bf16.mxu0 0
  %1423 = vmatpush1.bf16.msra.mxu0 0
  %1424 = vmatprep.subr.bf16.mxu0 0
  %1425 = vmatpush1.bf16.msra.mxu0 0
  %1426 = vmatprep.subr.bf16.mxu0 0
  %1427 = vmatpush1.bf16.msra.mxu0 0
  %1428 = vmatprep.subr.bf16.mxu0 0
  %1429 = vmatpush1.bf16.msra.mxu0 0
  %1430 = vmatprep.subr.bf16.mxu0 0
  %1431 = vmatpush1.bf16.msra.mxu0 0
  %1432 = vmatprep.subr.bf16.mxu0 0
  %1433 = vmatpush1.bf16.msra.mxu0 0
  %1434 = vmatprep.mubr.bf16.mxu0 0
  %1435 = vmatmul.mubr.bf16.gmra.mrb[0].mxu0 %v1400
  %v1436 = vpop.f32.mrb[0].mxu0
  %v1437 = vadd.f32 %v326, %v1436
  %v1438 = vpop.f32.mrb[0].mxu0
  %v1439 = vpop.f32.mrb[0].mxu0
  %v1440 = vpop.f32.mrb[0].mxu0
  %1441 = vdwg.mxu0
  %1442 = vmatprep.subr.bf16.mxu0 0
  %1443 = vmatpush1.bf16.msra.mxu0 %v398
  %1444 = vmatprep.subr.bf16.mxu0 0
  %1445 = vmatpush1.bf16.msra.mxu0 %v399
  %1446 = vmatprep.subr.bf16.mxu0 0
  %1447 = vmatpush1.bf16.msra.mxu0 0
  %1448 = vmatprep.subr.bf16.mxu0 0
  %1449 = vmatpush1.bf16.msra.mxu0 0
  %1450 = vmatprep.subr.bf16.mxu0 0
  %1451 = vmatpush1.bf16.msra.mxu0 0
  %1452 = vmatprep.subr.bf16.mxu0 0
  %1453 = vmatpush1.bf16.msra.mxu0 0
  %1454 = vmatprep.subr.bf16.mxu0 0
  %1455 = vmatpush1.bf16.msra.mxu0 0
  %1456 = vmatprep.subr.bf16.mxu0 0
  %1457 = vmatpush1.bf16.msra.mxu0 0
  %1458 = vmatprep.subr.bf16.mxu0 0
  %1459 = vmatpush1.bf16.msra.mxu0 0
  %1460 = vmatprep.subr.bf16.mxu0 0
  %1461 = vmatpush1.bf16.msra.mxu0 0
  %1462 = vmatprep.subr.bf16.mxu0 0
  %1463 = vmatpush1.bf16.msra.mxu0 0
  %1464 = vmatprep.subr.bf16.mxu0 0
  %1465 = vmatpush1.bf16.msra.mxu0 0
  %1466 = vmatprep.subr.bf16.mxu0 0
  %1467 = vmatpush1.bf16.msra.mxu0 0
  %1468 = vmatprep.subr.bf16.mxu0 0
  %1469 = vmatpush1.bf16.msra.mxu0 0
  %1470 = vmatprep.subr.bf16.mxu0 0
  %1471 = vmatpush1.bf16.msra.mxu0 0
  %1472 = vmatprep.subr.bf16.mxu0 0
  %1473 = vmatpush1.bf16.msra.mxu0 0
  %1474 = vmatprep.mubr.bf16.mxu0 0
  %1475 = vmatmul.mubr.bf16.gmra.mrb[0].mxu0 %v1400
  %v1476 = vpop.f32.mrb[0].mxu0
  %v1477 = vadd.f32 %v388, %v1476
  %v1478 = vpop.f32.mrb[0].mxu0
  %v1479 = vpop.f32.mrb[0].mxu0
  %v1480 = vpop.f32.mrb[0].mxu0
  %1481 = vdwg.mxu0
  %1482 = vmatprep.subr.bf16.mxu0 0
  %1483 = vmatpush1.bf16.msra.mxu0 %v456
  %1484 = vmatprep.subr.bf16.mxu0 0
  %1485 = vmatpush1.bf16.msra.mxu0 %v457
  %1486 = vmatprep.subr.bf16.mxu0 0
  %1487 = vmatpush1.bf16.msra.mxu0 0
  %1488 = vmatprep.subr.bf16.mxu0 0
  %1489 = vmatpush1.bf16.msra.mxu0 0
  %1490 = vmatprep.subr.bf16.mxu0 0
  %1491 = vmatpush1.bf16.msra.mxu0 0
  %1492 = vmatprep.subr.bf16.mxu0 0
  %1493 = vmatpush1.bf16.msra.mxu0 0
  %1494 = vmatprep.subr.bf16.mxu0 0
  %1495 = vmatpush1.bf16.msra.mxu0 0
  %1496 = vmatprep.subr.bf16.mxu0 0
  %1497 = vmatpush1.bf16.msra.mxu0 0
  %1498 = vmatprep.subr.bf16.mxu0 0
  %1499 = vmatpush1.bf16.msra.mxu0 0
  %1500 = vmatprep.subr.bf16.mxu0 0
  %1501 = vmatpush1.bf16.msra.mxu0 0
  %1502 = vmatprep.subr.bf16.mxu0 0
  %1503 = vmatpush1.bf16.msra.mxu0 0
  %1504 = vmatprep.subr.bf16.mxu0 0
  %1505 = vmatpush1.bf16.msra.mxu0 0
  %1506 = vmatprep.subr.bf16.mxu0 0
  %1507 = vmatpush1.bf16.msra.mxu0 0
  %1508 = vmatprep.subr.bf16.mxu0 0
  %1509 = vmatpush1.bf16.msra.mxu0 0
  %1510 = vmatprep.subr.bf16.mxu0 0
  %1511 = vmatpush1.bf16.msra.mxu0 0
  %1512 = vmatprep.subr.bf16.mxu0 0
  %1513 = vmatpush1.bf16.msra.mxu0 0
  %1514 = vmatprep.mubr.bf16.mxu0 0
  %1515 = vmatmul.mubr.bf16.gmra.mrb[0].mxu0 %v1400
  %v1516 = vpop.f32.mrb[0].mxu0
  %v1517 = vadd.f32 %v446, %v1516
  %v1518 = vpop.f32.mrb[0].mxu0
  %v1519 = vpop.f32.mrb[0].mxu0
  %v1520 = vpop.f32.mrb[0].mxu0
  %1521 = vdwg.mxu0
  %v1522 = vadd.f32 %v134, %v1437
  %v1523 = vxor.u32 %v1522, 2147483648
  %v1524 = vmul.f32 %v1523, 1.442695
  %v1525 = vpow.pop %v1524
  %v1526 = vadd.f32 %v1525, 1.0
  %v1527 = vrcp.pop %v1526
  %v1528 = vmul.f32 1.0, %v1527
  %v1529 = vadd.f32 %v216, %v1477
  %v1530 = vxor.u32 %v1529, 2147483648
  %v1531 = vmul.f32 %v1530, 1.442695
  %v1532 = vpow.pop %v1531
  %v1533 = vadd.f32 %v1532, 1.0
  %v1534 = vrcp.pop %v1533
  %v1535 = vmul.f32 1.0, %v1534
  %v1536 = vmul.f32 %v1528, %v1517
  %v1537 = vadd.f32 %v298, %v1536
  %v1538 = vtanh.pop %v1537
  %v1539 = vsub.f32 1.0, %v1535
  %v1540 = vmul.f32 %v1539, %v1538
  %v1541 = vmul.f32 %v1535, %v1396
  %v1542 = vadd.f32 %v1540, %v1541
  %1543 = vst.msk [vmem:[#allocation2 + $0x38] sm:$0xff] %vm340, %v1542
  %1544 = vst.msk [vmem:[%s9] sm:$0xff] %vm340, %v1542
  %v1545 = vld [vmem:[#allocation2] sm:$0xff]
  %v1546 = vld [vmem:[#allocation2 + $0x8] sm:$0xff]
  %v1547 = vld [vmem:[#allocation2 + $0x10] sm:$0xff]
  %v1548 = vld [vmem:[#allocation2 + $0x18] sm:$0xff]
  %v1549 = vld [vmem:[#allocation2 + $0x20] sm:$0xff]
  %v1550 = vld [vmem:[#allocation2 + $0x28] sm:$0xff]
  %v1551 = vld [vmem:[#allocation2 + $0x30] sm:$0xff]
  %v1552 = vld [vmem:[#allocation2 + $0x38] sm:$0xff]
  %v1553 = vpack.c.bf16 %v1546, %v1545
  %v1554 = vpack.c.bf16 %v1548, %v1547
  %v1555 = vpack.c.bf16 %v1550, %v1549
  %v1556 = vpack.c.bf16 %v1552, %v1551
  %v1557 = vld [vmem:[%s6] sm:$0xf]
  %v1558 = vld [vmem:[%s6 + $0x4] sm:$0xf]
  %v1559 = vld [vmem:[%s6 + $0x8] sm:$0xf]
  %v1560 = vld [vmem:[%s6 + $0xc] sm:$0xf]
  %v1561 = vld [vmem:[%s7] sm:$0x1]
  %v1563 = vlaneseq
  %v1564 = vshrl.u32 %v1563, 7
  %v1565 = vsub.s32 0, %v1564
  %v1566 = vrot.slane %v1561, %v1565
  %v1572 = vunpack.c.l.b16 %v1557
  %v1573 = vunpack.c.l.b16 %v1558
  %v1574 = vunpack.c.l.b16 %v1559
  %v1575 = vunpack.c.l.b16 %v1560
  %v1576 = vpack.c.b16 %v1573, %v1572
  %v1577 = vpack.c.b16 %v1575, %v1574
  %v1581 = vsel %vm340, %v1553, 0
  %v1584 = vsel %vm340, %v1554, 0
  %v1587 = vsel %vm340, %v1555, 0
  %v1590 = vsel %vm340, %v1556, 0
  %1592 = vmatprep.subr.bf16.mxu0 0
  %1593 = vmatpush1.bf16.msra.mxu0 %v1576
  %1594 = vmatprep.subr.bf16.mxu0 0
  %1595 = vmatpush1.bf16.msra.mxu0 %v1577
  %1596 = vmatprep.subr.bf16.mxu0 0
  %1597 = vmatpush1.bf16.msra.mxu0 0
  %1598 = vmatprep.subr.bf16.mxu0 0
  %1599 = vmatpush1.bf16.msra.mxu0 0
  %1600 = vmatprep.subr.bf16.mxu0 0
  %1601 = vmatpush1.bf16.msra.mxu0 0
  %1602 = vmatprep.subr.bf16.mxu0 0
  %1603 = vmatpush1.bf16.msra.mxu0 0
  %1604 = vmatprep.subr.bf16.mxu0 0
  %1605 = vmatpush1.bf16.msra.mxu0 0
  %1606 = vmatprep.subr.bf16.mxu0 0
  %1607 = vmatpush1.bf16.msra.mxu0 0
  %1608 = vmatprep.subr.bf16.mxu0 0
  %1609 = vmatpush1.bf16.msra.mxu0 0
  %1610 = vmatprep.subr.bf16.mxu0 0
  %1611 = vmatpush1.bf16.msra.mxu0 0
  %1612 = vmatprep.subr.bf16.mxu0 0
  %1613 = vmatpush1.bf16.msra.mxu0 0
  %1614 = vmatprep.subr.bf16.mxu0 0
  %1615 = vmatpush1.bf16.msra.mxu0 0
  %1616 = vmatprep.subr.bf16.mxu0 0
  %1617 = vmatpush1.bf16.msra.mxu0 0
  %1618 = vmatprep.subr.bf16.mxu0 0
  %1619 = vmatpush1.bf16.msra.mxu0 0
  %1620 = vmatprep.subr.bf16.mxu0 0
  %1621 = vmatpush1.bf16.msra.mxu0 0
  %1622 = vmatprep.subr.bf16.mxu0 0
  %1623 = vmatpush1.bf16.msra.mxu0 0
  %1624 = vmatprep.mubr.bf16.mxu0 0
  %1625 = vmatmul.mubr.bf16.gmra.mrb[0].mxu0 %v1581
  %v1626 = vpop.f32.mrb[0].mxu0
  %v1627 = vadd.f32 %v1566, %v1626
  %v1628 = vpop.f32.mrb[0].mxu0
  %v1629 = vpop.f32.mrb[0].mxu0
  %v1630 = vadd.f32 %v1566, %v1629
  %v1631 = vpop.f32.mrb[0].mxu0
  %1632 = vmatprep.mubr.bf16.mxu0 0
  %1633 = vmatmul.mubr.bf16.gmra.mrb[0].mxu0 %v1584
  %v1634 = vpop.f32.mrb[0].mxu0
  %v1635 = vadd.f32 %v1566, %v1634
  %v1636 = vpop.f32.mrb[0].mxu0
  %v1637 = vpop.f32.mrb[0].mxu0
  %v1638 = vadd.f32 %v1566, %v1637
  %v1639 = vpop.f32.mrb[0].mxu0
  %1640 = vmatprep.mubr.bf16.mxu0 0
  %1641 = vmatmul.mubr.bf16.gmra.mrb[0].mxu0 %v1587
  %v1642 = vpop.f32.mrb[0].mxu0
  %v1643 = vadd.f32 %v1566, %v1642
  %v1644 = vpop.f32.mrb[0].mxu0
  %v1645 = vpop.f32.mrb[0].mxu0
  %v1646 = vadd.f32 %v1566, %v1645
  %v1647 = vpop.f32.mrb[0].mxu0
  %1648 = vmatprep.mubr.bf16.mxu0 0
  %1649 = vmatmul.mubr.bf16.gmra.mrb[0].mxu0 %v1590
  %v1650 = vpop.f32.mrb[0].mxu0
  %v1651 = vadd.f32 %v1566, %v1650
  %v1652 = vpop.f32.mrb[0].mxu0
  %v1653 = vpop.f32.mrb[0].mxu0
  %v1654 = vadd.f32 %v1566, %v1653
  %v1655 = vpop.f32.mrb[0].mxu0
  %1656 = vdwg.mxu0
  %1657 = vst.msk [vmem:[%s8] sm:$0xff] %vm59, %v1627
  %1658 = vst.msk [vmem:[%s8 + $0x8] sm:$0xff] %vm59, %v1630
  %1659 = vst.msk [vmem:[%s8 + $0x10] sm:$0xff] %vm59, %v1635
  %1660 = vst.msk [vmem:[%s8 + $0x18] sm:$0xff] %vm59, %v1638
  %1661 = vst.msk [vmem:[%s8 + $0x20] sm:$0xff] %vm59, %v1643
  %1662 = vst.msk [vmem:[%s8 + $0x28] sm:$0xff] %vm59, %v1646
  %1663 = vst.msk [vmem:[%s8 + $0x30] sm:$0xff] %vm59, %v1651
  %1664 = vst.msk [vmem:[%s8 + $0x38] sm:$0xff] %vm59, %v1654
  // Predicated region
  $region34: #{recurrent_forward.1} parent=0 // pred_check
    _
  $region35: #{recurrent_forward.1} parent=0 // pred_check_branch
    %1666 = sbr.rel (0) target = $region37
  $region36: #{recurrent_forward.1} parent=0 // pred_region
    _
  $region37: #{recurrent_forward.1} parent=0 // pred_fallthru
    _
  // Predicated region
  $region38: #{recurrent_forward.1} parent=0 // pred_check
    _
  $region39: #{recurrent_forward.1} parent=0 // pred_check_branch
    %1668 = sbr.rel (0) target = $region41
  $region40: #{recurrent_forward.1} parent=0 // pred_region
    _
  $region41: #{recurrent_forward.1} parent=0 // pred_fallthru
    _
  // Predicated region
  $region42: #{recurrent_forward.1} parent=0 // pred_check
    _
  $region43: #{recurrent_forward.1} parent=0 // pred_check_branch
    %1670 = sbr.rel (0) target = $region45
  $region44: #{recurrent_forward.1} parent=0 // pred_region
    _
  $region45: #{recurrent_forward.1} parent=0 // pred_fallthru
    _
  // Predicated region
  $region46: #{recurrent_forward.1} parent=0 // pred_check
    _
  $region47: #{recurrent_forward.1} parent=0 // pred_check_branch
    %1672 = sbr.rel (0) target = $region49
  $region48: #{recurrent_forward.1} parent=0 // pred_region
    _
  $region49: #{recurrent_forward.1} parent=0 // pred_fallthru
    _

</llo_original>
